<compile_context>
chip_gen: v6e
topology: v6e:2x2x1
jax: 0.10.0
libtpu: 0.0.40
codegen_flags: <defaults>
</compile_context>

<pallas_src>
import functools
import math

import jax
import jax.numpy as jnp
from jax.experimental import pallas as pl
from jax.experimental.pallas import tpu as pltpu


def _attention_refinement_kernel(wp, x_ref, wt_ref, b1_ref, wse_ref, bse_ref,
                                 mask_ref, o_ref):
    """One grid step = `block_b` images packed onto sublanes.

    x_ref:    (1, block_b*C_in, P)               padded, flattened input
    wt_ref:   (9, block_b*C_out, block_b*C_in)   block-diag folded conv taps
    b1_ref:   (block_b*C_out, 1)                 folded conv3x3+BN1 bias
    wse_ref:  (block_b*C_out, block_b*C_out)     block-diag folded SE weight
    bse_ref:  (block_b*C_out, 1)                 folded conv1x1+BN2 bias
    mask_ref: (1, F)    1/(H*W) on valid columns, 0 on pad columns
    o_ref:    (1, block_b*C_out, F)
    """
    f = o_ref.shape[-1]
    bc_out = o_ref.shape[1]

    # ---- 3x3 conv: 9 shifted block-diagonal MXU matmuls over the block ----
    acc = jnp.zeros((bc_out, f), jnp.float32)
    for t in range(9):
        dy, dx = divmod(t, 3)
        s = dy * wp + dx                           # static flat shift of tap
        xs = x_ref[0, :, pl.ds(s, f)]              # (BC_in, F), native dtype
        acc = acc + jnp.dot(wt_ref[t], xs, preferred_element_type=jnp.float32)

    # ---- folded BN1 + ReLU, once over the whole sublane-packed slab --------
    fm = jnp.maximum(acc + b1_ref[...], 0.0)       # (BC_out, F)

    # ---- channel attention: masked global avg pool + block-diag 1x1 conv ---
    pooled = jnp.sum(fm * mask_ref[...], axis=-1, keepdims=True)   # (BC_out, 1)
    se = jnp.dot(wse_ref[...], pooled, preferred_element_type=jnp.float32)
    gate = jax.nn.sigmoid(se + bse_ref[...])                       # (BC_out, 1)

    o_ref[0] = (fm * gate).astype(o_ref.dtype)


def _round_up(x, m):
    return (x + m - 1) // m * m


def _vmem_limit_bytes():
    # 64 MiB scoped limit on 128-MiB-VMEM parts (v5e/v6e), 32 MiB on 64-MiB
    # parts (v7x).  Fall back to the v7x-safe value if the query fails.
    try:
        cap = int(pltpu.get_tpu_info().vmem_capacity_bytes)
    except Exception:
        cap = 64 * 1024 * 1024
    return 64 * 1024 * 1024 if cap >= 128 * 1024 * 1024 else 32 * 1024 * 1024


def _pick_block_b(batch, c_in, c_out, p, f, act_itemsize, budget_bytes):
    cap = 8
    if batch >= 2:
        cap = min(cap, max(1, batch // 2))   # keep grid >= 2 (v7x 2 TCs, pipelining)
    cap = min(cap, batch)
    best = 1
    for cand in range(1, cap + 1):
        in_bytes = _round_up(cand * c_in, 8) * _round_up(p, 128) * act_itemsize
        out_bytes = _round_up(cand * c_out, 8) * f * act_itemsize
        acc_bytes = _round_up(cand * c_out, 8) * f * 4          # f32 fm/acc slab
        w_bytes = 9 * _round_up(cand * c_out, 8) * _round_up(cand * c_in, 128) * 4
        need = 2 * (in_bytes + out_bytes + w_bytes) + acc_bytes + (2 << 20)
        if need <= budget_bytes:
            best = cand
    return best


def attention_refinement(x, conv_w, bn1_gamma, bn1_beta, bn1_mean, bn1_var,
                         se_w, bn2_gamma, bn2_beta, bn2_mean, bn2_var,
                         *, eps=1e-5):
    """x: (B, C_in, H, W) NCHW.  Returns (B, C_out, H, W)."""
    b, c_in, h, w = x.shape
    c_out = conv_w.shape[0]

    # ---- spatial layout: lane-pad the flattened row span to 128 ------------
    wp = _round_up(w + 2, 128 // math.gcd(h, 128))   # >= w+2, h*wp % 128 == 0
    f = h * wp                                       # flattened output span
    hp = h + 3                                       # top/bottom pad + spill row
    p = hp * wp                                      # flattened padded input

    # ---- compute dtype: native MXU path for bf16, f32 otherwise ------------
    compute_dtype = jnp.bfloat16 if x.dtype == jnp.bfloat16 else jnp.float32
    if x.dtype != compute_dtype and x.dtype != jnp.float32:
        x = x.astype(compute_dtype)
    act_itemsize = jnp.dtype(x.dtype).itemsize

    # ---- block_b (images per grid step), batch padding ---------------------
    vmem_limit = _vmem_limit_bytes()
    budget = int(vmem_limit * 0.55)
    block_b = _pick_block_b(b, c_in, c_out, p, f, act_itemsize, budget)
    b_pad = _round_up(b, block_b)
    num_blocks = b_pad // block_b
    bc_in = block_b * c_in
    bc_out = block_b * c_out

    # ---- fold BN1 into the 3x3 conv (inference mode) ------------------------
    s1 = bn1_gamma / jnp.sqrt(bn1_var + eps)
    w_eff = conv_w.astype(jnp.float32) * s1[:, None, None, None]   # (Co,Ci,3,3)
    b_eff = (bn1_beta - bn1_mean * s1).astype(jnp.float32)         # (Co,)

    # ---- fold BN2 into the 1x1 SE conv --------------------------------------
    s2 = bn2_gamma / jnp.sqrt(bn2_var + eps)
    wse_eff = se_w.reshape(c_out, c_out).astype(jnp.float32) * s2[:, None]
    bse_eff = (bn2_beta - bn2_mean * s2).astype(jnp.float32)       # (Co,)

    # ---- block-diagonal expansion so the whole block is one sublane slab ----
    eye_b = jnp.eye(block_b, dtype=jnp.float32)
    w_taps = jnp.transpose(w_eff, (2, 3, 0, 1)).reshape(9, c_out, c_in)
    w_taps_bd = jnp.einsum("ab,toi->taobi", eye_b, w_taps).reshape(
        9, bc_out, bc_in).astype(compute_dtype)
    wse_bd = jnp.einsum("ab,oi->aobi", eye_b, wse_eff).reshape(bc_out, bc_out)
    b_slab = jnp.tile(b_eff.reshape(c_out, 1), (block_b, 1))       # (BCo, 1)
    bse_slab = jnp.tile(bse_eff.reshape(c_out, 1), (block_b, 1))   # (BCo, 1)

    # ---- zero-pad batch + spatial; flatten; keep activation dtype ----------
    xb = x
    if b_pad > b:
        xb = jnp.pad(xb, ((0, b_pad - b), (0, 0), (0, 0), (0, 0)))
    xp = jnp.pad(xb, ((0, 0), (0, 0), (1, hp - h - 1), (1, wp - w - 1)))
    xf = xp.reshape(num_blocks, bc_in, p)

    # Pooling mask with 1/(H*W) pre-folded (valid columns only).
    col = jnp.arange(f, dtype=jnp.int32) % wp
    mask = jnp.where(col < w, 1.0 / (h * w), 0.0).astype(jnp.float32)
    mask = mask.reshape(1, f)

    kernel = functools.partial(_attention_refinement_kernel, wp)

    out_flat = pl.pallas_call(
        kernel,
        out_shape=jax.ShapeDtypeStruct((num_blocks, bc_out, f), x.dtype),
        grid_spec=pltpu.PrefetchScalarGridSpec(
            num_scalar_prefetch=0,
            grid=(num_blocks,),
            in_specs=[
                pl.BlockSpec((1, bc_in, p), lambda i: (i, 0, 0)),
                pl.BlockSpec((9, bc_out, bc_in), lambda i: (0, 0, 0)),
                pl.BlockSpec((bc_out, 1), lambda i: (0, 0)),
                pl.BlockSpec((bc_out, bc_out), lambda i: (0, 0)),
                pl.BlockSpec((bc_out, 1), lambda i: (0, 0)),
                pl.BlockSpec((1, f), lambda i: (0, 0)),
            ],
            out_specs=pl.BlockSpec((1, bc_out, f), lambda i: (i, 0, 0)),
        ),
        compiler_params=pltpu.CompilerParams(
            dimension_semantics=("parallel",),
            vmem_limit_bytes=vmem_limit),
    )(xf, w_taps_bd, b_slab, wse_bd, bse_slab, mask)

    # Drop pad columns / pad batch and restore NCHW.
    out = out_flat.reshape(b_pad, c_out, h, wp)[:b, :, :, :w]
    return out


def attention_refinement_ref(x, conv_w, bn1_gamma, bn1_beta, bn1_mean, bn1_var,
                             se_w, bn2_gamma, bn2_beta, bn2_mean, bn2_var,
                             eps=1e-5):
    # Pure-JAX reference mirroring the PyTorch forward (eval-mode BN).
    c_out = conv_w.shape[0]
    fm = jax.lax.conv_general_dilated(
        x, conv_w, window_strides=(1, 1), padding=((1, 1), (1, 1)),
        dimension_numbers=("NCHW", "OIHW", "NCHW"),
        precision=jax.lax.Precision.HIGHEST)
    fm = ((fm - bn1_mean[None, :, None, None])
          / jnp.sqrt(bn1_var[None, :, None, None] + eps)
          * bn1_gamma[None, :, None, None] + bn1_beta[None, :, None, None])
    fm = jnp.maximum(fm, 0.0)
    pooled = jnp.mean(fm, axis=(2, 3))                          # (B, C_out)
    se = jnp.einsum("bi,oi->bo", pooled, se_w.reshape(c_out, c_out),
                    precision=jax.lax.Precision.HIGHEST)
    se = (se - bn2_mean) / jnp.sqrt(bn2_var + eps) * bn2_gamma + bn2_beta
    se = jax.nn.sigmoid(se)
    return fm * se[:, :, None, None]


if __name__ == "__main__":
    # AttentionRefinement(in_planes=8, out_planes=4) at small spatial size.
    B, C_IN, C_OUT, H, W = 2, 8, 4, 16, 16

    key = jax.random.PRNGKey(0)
    ks = jax.random.split(key, 12)
    x = jax.random.normal(ks[0], (B, C_IN, H, W), jnp.float32)

    conv_w = jax.random.normal(ks[1], (C_OUT, C_IN, 3, 3), jnp.float32) * 0.2
    bn1_gamma = jax.random.uniform(ks[2], (C_OUT,), jnp.float32, 0.5, 1.5)
    bn1_beta = jax.random.normal(ks[3], (C_OUT,), jnp.float32) * 0.1
    bn1_mean = jax.random.normal(ks[4], (C_OUT,), jnp.float32) * 0.1
    bn1_var = jax.random.uniform(ks[5], (C_OUT,), jnp.float32, 0.5, 1.5)

    se_w = jax.random.normal(ks[6], (C_OUT, C_OUT, 1, 1), jnp.float32) * 0.3
    bn2_gamma = jax.random.uniform(ks[7], (C_OUT,), jnp.float32, 0.5, 1.5)
    bn2_beta = jax.random.normal(ks[8], (C_OUT,), jnp.float32) * 0.1
    bn2_mean = jax.random.normal(ks[9], (C_OUT,), jnp.float32) * 0.1
    bn2_var = jax.random.uniform(ks[10], (C_OUT,), jnp.float32, 0.5, 1.5)

    out = attention_refinement(x, conv_w, bn1_gamma, bn1_beta, bn1_mean,
                               bn1_var, se_w, bn2_gamma, bn2_beta, bn2_mean,
                               bn2_var)
    jax.block_until_ready(out)

    ref = attention_refinement_ref(x, conv_w, bn1_gamma, bn1_beta, bn1_mean,
                                   bn1_var, se_w, bn2_gamma, bn2_beta,
                                   bn2_mean, bn2_var)
    assert out.shape == ref.shape, (out.shape, ref.shape)
    err = float(jnp.max(jnp.abs(out - ref)))
    assert err < 5e-4, f"max abs error {err}"
    print("KERNEL_OK")
</pallas_src>

<mosaic_0001>
module attributes {stable_mosaic.version = 11 : i64} {
  func.func @_attention_refinement_kernel(%arg0: i32, %arg1: memref<1x8x456xf32, #tpu.memory_space<vmem>>, %arg2: memref<9x4x8xf32, #tpu.memory_space<vmem>>, %arg3: memref<4x1xf32, #tpu.memory_space<vmem>>, %arg4: memref<4x4xf32, #tpu.memory_space<vmem>>, %arg5: memref<4x1xf32, #tpu.memory_space<vmem>>, %arg6: memref<1x384xf32, #tpu.memory_space<vmem>>, %arg7: memref<1x4x384xf32, #tpu.memory_space<vmem>>) attributes {dimension_semantics = [#tpu.dimension_semantics<parallel>], iteration_bounds = array<i64: 2>, scalar_prefetch = 0 : i64, scratch_operands = 0 : i64, tpu.core_type = #tpu.core_type<tc>, window_params = [{transform_indices = @transform_0, window_bounds = array<i64: 1, 8, 456>}, {pipeline_mode = #tpu.pipeline_mode<synchronous>, transform_indices = @transform_1, window_bounds = array<i64: 9, 4, 8>}, {pipeline_mode = #tpu.pipeline_mode<synchronous>, transform_indices = @transform_2, window_bounds = array<i64: 4, 1>}, {pipeline_mode = #tpu.pipeline_mode<synchronous>, transform_indices = @transform_3, window_bounds = array<i64: 4, 4>}, {pipeline_mode = #tpu.pipeline_mode<synchronous>, transform_indices = @transform_4, window_bounds = array<i64: 4, 1>}, {pipeline_mode = #tpu.pipeline_mode<synchronous>, transform_indices = @transform_5, window_bounds = array<i64: 1, 384>}, {transform_indices = @transform_6, window_bounds = array<i64: 1, 4, 384>}]} {
    %cst = arith.constant 0.000000e+00 : f32
    %0 = vector.broadcast %cst : f32 to vector<4x384xf32>
    %c0 = arith.constant 0 : index
    %c0_0 = arith.constant 0 : index
    %c0_1 = arith.constant 0 : index
    %1 = vector.load %arg1[%c0, %c0_0, %c0_1] : memref<1x8x456xf32, #tpu.memory_space<vmem>>, vector<1x8x384xf32>
    %2 = vector.shape_cast %1 : vector<1x8x384xf32> to vector<8x384xf32>
    %c0_2 = arith.constant 0 : index
    %c0_3 = arith.constant 0 : index
    %c0_4 = arith.constant 0 : index
    %3 = vector.load %arg2[%c0_2, %c0_3, %c0_4] : memref<9x4x8xf32, #tpu.memory_space<vmem>>, vector<1x4x8xf32>
    %4 = vector.shape_cast %3 : vector<1x4x8xf32> to vector<4x8xf32>
    %cst_5 = arith.constant dense<0.000000e+00> : vector<4x384xf32>
    %5 = tpu.matmul %4, %2, %cst_5 {dimension_numbers = #tpu.dot_dimension_numbers<[1], [0], [0], [1], [0, 0, 1, 1], [], []>} : vector<4x8xf32>, vector<8x384xf32>, vector<4x384xf32> -> vector<4x384xf32>
    %6 = arith.addf %0, %5 : vector<4x384xf32>
    %c0_6 = arith.constant 0 : index
    %c0_7 = arith.constant 0 : index
    %c1 = arith.constant 1 : index
    %7 = vector.load %arg1[%c0_6, %c0_7, %c1] : memref<1x8x456xf32, #tpu.memory_space<vmem>>, vector<1x8x384xf32>
    %8 = vector.shape_cast %7 : vector<1x8x384xf32> to vector<8x384xf32>
    %c1_8 = arith.constant 1 : index
    %c0_9 = arith.constant 0 : index
    %c0_10 = arith.constant 0 : index
    %9 = vector.load %arg2[%c1_8, %c0_9, %c0_10] : memref<9x4x8xf32, #tpu.memory_space<vmem>>, vector<1x4x8xf32>
    %10 = vector.shape_cast %9 : vector<1x4x8xf32> to vector<4x8xf32>
    %cst_11 = arith.constant dense<0.000000e+00> : vector<4x384xf32>
    %11 = tpu.matmul %10, %8, %cst_11 {dimension_numbers = #tpu.dot_dimension_numbers<[1], [0], [0], [1], [0, 0, 1, 1], [], []>} : vector<4x8xf32>, vector<8x384xf32>, vector<4x384xf32> -> vector<4x384xf32>
    %12 = arith.addf %6, %11 : vector<4x384xf32>
    %c0_12 = arith.constant 0 : index
    %c0_13 = arith.constant 0 : index
    %c2 = arith.constant 2 : index
    %13 = vector.load %arg1[%c0_12, %c0_13, %c2] : memref<1x8x456xf32, #tpu.memory_space<vmem>>, vector<1x8x384xf32>
    %14 = vector.shape_cast %13 : vector<1x8x384xf32> to vector<8x384xf32>
    %c2_14 = arith.constant 2 : index
    %c0_15 = arith.constant 0 : index
    %c0_16 = arith.constant 0 : index
    %15 = vector.load %arg2[%c2_14, %c0_15, %c0_16] : memref<9x4x8xf32, #tpu.memory_space<vmem>>, vector<1x4x8xf32>
    %16 = vector.shape_cast %15 : vector<1x4x8xf32> to vector<4x8xf32>
    %cst_17 = arith.constant dense<0.000000e+00> : vector<4x384xf32>
    %17 = tpu.matmul %16, %14, %cst_17 {dimension_numbers = #tpu.dot_dimension_numbers<[1], [0], [0], [1], [0, 0, 1, 1], [], []>} : vector<4x8xf32>, vector<8x384xf32>, vector<4x384xf32> -> vector<4x384xf32>
    %18 = arith.addf %12, %17 : vector<4x384xf32>
    %c0_18 = arith.constant 0 : index
    %c0_19 = arith.constant 0 : index
    %c24 = arith.constant 24 : index
    %19 = vector.load %arg1[%c0_18, %c0_19, %c24] : memref<1x8x456xf32, #tpu.memory_space<vmem>>, vector<1x8x384xf32>
    %20 = vector.shape_cast %19 : vector<1x8x384xf32> to vector<8x384xf32>
    %c3 = arith.constant 3 : index
    %c0_20 = arith.constant 0 : index
    %c0_21 = arith.constant 0 : index
    %21 = vector.load %arg2[%c3, %c0_20, %c0_21] : memref<9x4x8xf32, #tpu.memory_space<vmem>>, vector<1x4x8xf32>
    %22 = vector.shape_cast %21 : vector<1x4x8xf32> to vector<4x8xf32>
    %cst_22 = arith.constant dense<0.000000e+00> : vector<4x384xf32>
    %23 = tpu.matmul %22, %20, %cst_22 {dimension_numbers = #tpu.dot_dimension_numbers<[1], [0], [0], [1], [0, 0, 1, 1], [], []>} : vector<4x8xf32>, vector<8x384xf32>, vector<4x384xf32> -> vector<4x384xf32>
    %24 = arith.addf %18, %23 : vector<4x384xf32>
    %c0_23 = arith.constant 0 : index
    %c0_24 = arith.constant 0 : index
    %c25 = arith.constant 25 : index
    %25 = vector.load %arg1[%c0_23, %c0_24, %c25] : memref<1x8x456xf32, #tpu.memory_space<vmem>>, vector<1x8x384xf32>
    %26 = vector.shape_cast %25 : vector<1x8x384xf32> to vector<8x384xf32>
    %c4 = arith.constant 4 : index
    %c0_25 = arith.constant 0 : index
    %c0_26 = arith.constant 0 : index
    %27 = vector.load %arg2[%c4, %c0_25, %c0_26] : memref<9x4x8xf32, #tpu.memory_space<vmem>>, vector<1x4x8xf32>
    %28 = vector.shape_cast %27 : vector<1x4x8xf32> to vector<4x8xf32>
    %cst_27 = arith.constant dense<0.000000e+00> : vector<4x384xf32>
    %29 = tpu.matmul %28, %26, %cst_27 {dimension_numbers = #tpu.dot_dimension_numbers<[1], [0], [0], [1], [0, 0, 1, 1], [], []>} : vector<4x8xf32>, vector<8x384xf32>, vector<4x384xf32> -> vector<4x384xf32>
    %30 = arith.addf %24, %29 : vector<4x384xf32>
    %c0_28 = arith.constant 0 : index
    %c0_29 = arith.constant 0 : index
    %c26 = arith.constant 26 : index
    %31 = vector.load %arg1[%c0_28, %c0_29, %c26] : memref<1x8x456xf32, #tpu.memory_space<vmem>>, vector<1x8x384xf32>
    %32 = vector.shape_cast %31 : vector<1x8x384xf32> to vector<8x384xf32>
    %c5 = arith.constant 5 : index
    %c0_30 = arith.constant 0 : index
    %c0_31 = arith.constant 0 : index
    %33 = vector.load %arg2[%c5, %c0_30, %c0_31] : memref<9x4x8xf32, #tpu.memory_space<vmem>>, vector<1x4x8xf32>
    %34 = vector.shape_cast %33 : vector<1x4x8xf32> to vector<4x8xf32>
    %cst_32 = arith.constant dense<0.000000e+00> : vector<4x384xf32>
    %35 = tpu.matmul %34, %32, %cst_32 {dimension_numbers = #tpu.dot_dimension_numbers<[1], [0], [0], [1], [0, 0, 1, 1], [], []>} : vector<4x8xf32>, vector<8x384xf32>, vector<4x384xf32> -> vector<4x384xf32>
    %36 = arith.addf %30, %35 : vector<4x384xf32>
    %c0_33 = arith.constant 0 : index
    %c0_34 = arith.constant 0 : index
    %c48 = arith.constant 48 : index
    %37 = vector.load %arg1[%c0_33, %c0_34, %c48] : memref<1x8x456xf32, #tpu.memory_space<vmem>>, vector<1x8x384xf32>
    %38 = vector.shape_cast %37 : vector<1x8x384xf32> to vector<8x384xf32>
    %c6 = arith.constant 6 : index
    %c0_35 = arith.constant 0 : index
    %c0_36 = arith.constant 0 : index
    %39 = vector.load %arg2[%c6, %c0_35, %c0_36] : memref<9x4x8xf32, #tpu.memory_space<vmem>>, vector<1x4x8xf32>
    %40 = vector.shape_cast %39 : vector<1x4x8xf32> to vector<4x8xf32>
    %cst_37 = arith.constant dense<0.000000e+00> : vector<4x384xf32>
    %41 = tpu.matmul %40, %38, %cst_37 {dimension_numbers = #tpu.dot_dimension_numbers<[1], [0], [0], [1], [0, 0, 1, 1], [], []>} : vector<4x8xf32>, vector<8x384xf32>, vector<4x384xf32> -> vector<4x384xf32>
    %42 = arith.addf %36, %41 : vector<4x384xf32>
    %c0_38 = arith.constant 0 : index
    %c0_39 = arith.constant 0 : index
    %c49 = arith.constant 49 : index
    %43 = vector.load %arg1[%c0_38, %c0_39, %c49] : memref<1x8x456xf32, #tpu.memory_space<vmem>>, vector<1x8x384xf32>
    %44 = vector.shape_cast %43 : vector<1x8x384xf32> to vector<8x384xf32>
    %c7 = arith.constant 7 : index
    %c0_40 = arith.constant 0 : index
    %c0_41 = arith.constant 0 : index
    %45 = vector.load %arg2[%c7, %c0_40, %c0_41] : memref<9x4x8xf32, #tpu.memory_space<vmem>>, vector<1x4x8xf32>
    %46 = vector.shape_cast %45 : vector<1x4x8xf32> to vector<4x8xf32>
    %cst_42 = arith.constant dense<0.000000e+00> : vector<4x384xf32>
    %47 = tpu.matmul %46, %44, %cst_42 {dimension_numbers = #tpu.dot_dimension_numbers<[1], [0], [0], [1], [0, 0, 1, 1], [], []>} : vector<4x8xf32>, vector<8x384xf32>, vector<4x384xf32> -> vector<4x384xf32>
    %48 = arith.addf %42, %47 : vector<4x384xf32>
    %c0_43 = arith.constant 0 : index
    %c0_44 = arith.constant 0 : index
    %c50 = arith.constant 50 : index
    %49 = vector.load %arg1[%c0_43, %c0_44, %c50] : memref<1x8x456xf32, #tpu.memory_space<vmem>>, vector<1x8x384xf32>
    %50 = vector.shape_cast %49 : vector<1x8x384xf32> to vector<8x384xf32>
    %c8 = arith.constant 8 : index
    %c0_45 = arith.constant 0 : index
    %c0_46 = arith.constant 0 : index
    %51 = vector.load %arg2[%c8, %c0_45, %c0_46] : memref<9x4x8xf32, #tpu.memory_space<vmem>>, vector<1x4x8xf32>
    %52 = vector.shape_cast %51 : vector<1x4x8xf32> to vector<4x8xf32>
    %cst_47 = arith.constant dense<0.000000e+00> : vector<4x384xf32>
    %53 = tpu.matmul %52, %50, %cst_47 {dimension_numbers = #tpu.dot_dimension_numbers<[1], [0], [0], [1], [0, 0, 1, 1], [], []>} : vector<4x8xf32>, vector<8x384xf32>, vector<4x384xf32> -> vector<4x384xf32>
    %54 = arith.addf %48, %53 : vector<4x384xf32>
    %c0_48 = arith.constant 0 : index
    %c0_49 = arith.constant 0 : index
    %55 = vector.load %arg3[%c0_48, %c0_49] : memref<4x1xf32, #tpu.memory_space<vmem>>, vector<4x1xf32>
    %56 = vector.broadcast %55 : vector<4x1xf32> to vector<4x384xf32>
    %57 = arith.addf %54, %56 : vector<4x384xf32>
    %cst_50 = arith.constant 0.000000e+00 : f32
    %58 = vector.broadcast %cst_50 : f32 to vector<4x384xf32>
    %59 = arith.maximumf %57, %58 : vector<4x384xf32>
    %c0_51 = arith.constant 0 : index
    %c0_52 = arith.constant 0 : index
    %60 = vector.load %arg6[%c0_51, %c0_52] : memref<1x384xf32, #tpu.memory_space<vmem>>, vector<1x384xf32>
    %61 = vector.broadcast %60 : vector<1x384xf32> to vector<4x384xf32>
    %62 = arith.mulf %59, %61 : vector<4x384xf32>
    %cst_53 = arith.constant dense<0.000000e+00> : vector<4xf32>
    %63 = vector.multi_reduction <add>, %62, %cst_53 [1] : vector<4x384xf32> to vector<4xf32>
    %64 = vector.shape_cast %63 : vector<4xf32> to vector<4x1xf32>
    %c0_54 = arith.constant 0 : index
    %c0_55 = arith.constant 0 : index
    %65 = vector.load %arg4[%c0_54, %c0_55] : memref<4x4xf32, #tpu.memory_space<vmem>>, vector<4x4xf32>
    %cst_56 = arith.constant dense<0.000000e+00> : vector<4x1xf32>
    %66 = tpu.matmul %65, %64, %cst_56 {dimension_numbers = #tpu.dot_dimension_numbers<[1], [0], [0], [1], [0, 0, 1, 1], [], []>} : vector<4x4xf32>, vector<4x1xf32>, vector<4x1xf32> -> vector<4x1xf32>
    %c0_57 = arith.constant 0 : index
    %c0_58 = arith.constant 0 : index
    %67 = vector.load %arg5[%c0_57, %c0_58] : memref<4x1xf32, #tpu.memory_space<vmem>>, vector<4x1xf32>
    %68 = arith.addf %66, %67 : vector<4x1xf32>
    %69 = arith.negf %68 : vector<4x1xf32>
    %70 = math.exp %69 : vector<4x1xf32>
    %cst_59 = arith.constant 1.000000e+00 : f32
    %71 = vector.broadcast %cst_59 : f32 to vector<4x1xf32>
    %72 = arith.addf %71, %70 : vector<4x1xf32>
    %73 = arith.divf %71, %72 : vector<4x1xf32>
    %74 = vector.broadcast %73 : vector<4x1xf32> to vector<4x384xf32>
    %75 = arith.mulf %59, %74 : vector<4x384xf32>
    %c0_60 = arith.constant 0 : index
    %c0_61 = arith.constant 0 : index
    %c0_62 = arith.constant 0 : index
    %76 = vector.load %arg7[%c0_60, %c0_61, %c0_62] : memref<1x4x384xf32, #tpu.memory_space<vmem>>, vector<1x4x384xf32>
    %77 = vector.shape_cast %76 : vector<1x4x384xf32> to vector<4x384xf32>
    %78 = vector.shape_cast %75 : vector<4x384xf32> to vector<1x4x384xf32>
    tpu.vector_store %arg7[%c0_60, %c0_61, %c0_62], %78 {strides = array<i32>} : memref<1x4x384xf32, #tpu.memory_space<vmem>>, vector<1x4x384xf32>,
    return
  }
  func.func @transform_0(%arg0: i32) -> (i32, i32, i32) {
    %c0_i32 = arith.constant 0 : i32
    %c0_i32_0 = arith.constant 0 : i32
    %c0_i32_1 = arith.constant 0 : i32
    return %arg0, %c0_i32, %c0_i32_0 : i32, i32, i32
  }
  func.func @transform_1(%arg0: i32) -> (i32, i32, i32) {
    %c0_i32 = arith.constant 0 : i32
    %c0_i32_0 = arith.constant 0 : i32
    %c0_i32_1 = arith.constant 0 : i32
    %c0_i32_2 = arith.constant 0 : i32
    return %c0_i32, %c0_i32_0, %c0_i32_1 : i32, i32, i32
  }
  func.func @transform_2(%arg0: i32) -> (i32, i32) {
    %c0_i32 = arith.constant 0 : i32
    %c0_i32_0 = arith.constant 0 : i32
    %c0_i32_1 = arith.constant 0 : i32
    return %c0_i32, %c0_i32_0 : i32, i32
  }
  func.func @transform_3(%arg0: i32) -> (i32, i32) {
    %c0_i32 = arith.constant 0 : i32
    %c0_i32_0 = arith.constant 0 : i32
    %c0_i32_1 = arith.constant 0 : i32
    return %c0_i32, %c0_i32_0 : i32, i32
  }
  func.func @transform_4(%arg0: i32) -> (i32, i32) {
    %c0_i32 = arith.constant 0 : i32
    %c0_i32_0 = arith.constant 0 : i32
    %c0_i32_1 = arith.constant 0 : i32
    return %c0_i32, %c0_i32_0 : i32, i32
  }
  func.func @transform_5(%arg0: i32) -> (i32, i32) {
    %c0_i32 = arith.constant 0 : i32
    %c0_i32_0 = arith.constant 0 : i32
    %c0_i32_1 = arith.constant 0 : i32
    return %c0_i32, %c0_i32_0 : i32, i32
  }
  func.func @transform_6(%arg0: i32) -> (i32, i32, i32) {
    %c0_i32 = arith.constant 0 : i32
    %c0_i32_0 = arith.constant 0 : i32
    %c0_i32_1 = arith.constant 0 : i32
    return %arg0, %c0_i32, %c0_i32_0 : i32, i32, i32
  }
}

</mosaic_0001>

<llo_original>
// kernel: tpu_custom_call.1
$region0: #{tpu_custom_call.1}
  #allocation0 [shape = 'u32[]', space=smem, size = 0x4, offset = 0x4, fixed_abs, tag = 'smem constant byte address 0x4 - core index']
  #allocation1 [shape = 'u32[144,128]{1,0:T(1,128)}', space=vmem, size = 0x12000, scoped, tag = 'internal scratch']
  %s0 = inlined_call_operand.vmem [shape: f32[2,8,456], index: 0, kind: input, shape index: {}]
  %s1 = inlined_call_operand.vmem [shape: f32[9,4,8], index: 1, kind: input, shape index: {}]
  %s2 = inlined_call_operand.vmem [shape: f32[4,1], index: 2, kind: input, shape index: {}]
  %s3 = inlined_call_operand.vmem [shape: f32[4,4], index: 3, kind: input, shape index: {}]
  %s4 = inlined_call_operand.vmem [shape: f32[4,1], index: 4, kind: input, shape index: {}]
  %s5 = inlined_call_operand.vmem [shape: f32[1,384], index: 5, kind: input, shape index: {}]
  %s6 = inlined_call_operand.hbm [shape: f32[2,4,384], index: 6, kind: output, shape index: {}]
  %s7 = sld [smem:[#allocation0]]
  $region57: #{tpu_custom_call.1} parent=0
    _
  %s9 = ssub.s32 1, %s7
  %s10 = scalar_select 0, %s9, %s7
  $region1: #{tpu_custom_call.1} parent=0
    #allocation2 [shape = 'u8[12288]{0}', space=vmem, size = 0x3000, scoped, tag = 'output window, operand 0']
    #allocation3 [shape = 's32[2]{0}', space=sflag, size = 0x8, scoped, tag = 'scoped memory for tpu_custom_call.1']
    %11 = vsyncpa [#allocation3], 0
    %s12 = scalar_lea.sflag [#allocation3], 1
    %13 = vsyncpa %s12, 0
    loop: start=0, step=1, limit=4
    $region2: #{tpu_custom_call.1} parent=1 // loop_pre_header
      _
    $region3: #{tpu_custom_call.1} parent=1 // loop_header
      %s15 = sphi 0, %s19
      %p16 = scmp.ge.s32.totalorder %s15, 4
      %s25 = sphi 0, %s27
      %s28 = sphi 0, %s25
      %s29 = sphi 0, %s28
      %s45 = sphi 0, %s29
      %s49 = sphi 0, %s49
      %s51 = sphi 0, %s49
      %s52 = sphi 0, %s51
      %s66 = sphi 0, %s52
      %s70 = sphi 0, %s70
      %s72 = sphi 0, %s70
      %s73 = sphi 0, %s72
      %s87 = sphi 0, %s73
      %s91 = sphi 0, %s91
      %s93 = sphi 0, %s91
      %s94 = sphi 0, %s93
      %s108 = sphi 0, %s94
      %s112 = sphi 0, %s112
      %s114 = sphi 0, %s112
      %s115 = sphi 0, %s114
      %s129 = sphi 0, %s115
      %s133 = sphi 0, %s133
      %s135 = sphi 0, %s133
      %s136 = sphi 0, %s135
      %s150 = sphi 0, %s136
      %s156 = sphi 0, %s158
      %s159 = sphi 0, %s156
      %s160 = sphi 0, %s159
      %s176 = sphi 0, %s160
    $region4: #{tpu_custom_call.1} parent=1 // loop_header_branch
      %18 = sbr.rel (%p16) target = $region8
    $region5: #{tpu_custom_call.1} parent=1 // loop_body
      %s20 = ssub.s32 %s15, 1
      %s21 = ssub.s32 %s15, 2
      %s22 = sadd.s32 %s15, 1
      %s23 = ssub.s32 %s15, %s22
      %p24 = scmp.eq.s32.totalorder %s23, 0
      %s26 = sadd.s32 %s25, 1
      %s27 = scalar_select %p24, %s25, %s26
      %p30 = pneg %p24
      %p31 = scmp.eq.s32.totalorder %s15, 1
      %p32 = por %p30, %p31
      %p33 = scmp.ne.s32.totalorder %s25, %s28
      %p34 = scmp.eq.s32.totalorder %s15, 0
      %p35 = por %p33, %p34
      %p36 = scmp.ne.s32.totalorder %s25, %s28
      %p37 = scmp.eq.s32.totalorder %s20, 1
      %p38 = por %p36, %p37
      %p39 = scmp.ne.s32.totalorder %s28, %s29
      %p40 = scmp.eq.s32.totalorder %s20, 0
      %p41 = por %p39, %p40
      %p42 = scmp.ne.s32.totalorder %s28, %s29
      %p43 = scmp.eq.s32.totalorder %s21, 1
      %p44 = por %p42, %p43
      %p46 = scmp.ne.s32.totalorder %s29, %s45
      %p47 = scmp.eq.s32.totalorder %s21, 0
      %p48 = por %p46, %p47
      %s50 = sadd.s32 %s49, 1
      %p53 = scmp.eq.s32.totalorder %s15, 1
      %p54 = scmp.ne.s32.totalorder %s49, %s51
      %p55 = scmp.eq.s32.totalorder %s15, 0
      %p56 = por %p54, %p55
      %p57 = scmp.ne.s32.totalorder %s49, %s51
      %p58 = scmp.eq.s32.totalorder %s20, 1
      %p59 = por %p57, %p58
      %p60 = scmp.ne.s32.totalorder %s51, %s52
      %p61 = scmp.eq.s32.totalorder %s20, 0
      %p62 = por %p60, %p61
      %p63 = scmp.ne.s32.totalorder %s51, %s52
      %p64 = scmp.eq.s32.totalorder %s21, 1
      %p65 = por %p63, %p64
      %p67 = scmp.ne.s32.totalorder %s52, %s66
      %p68 = scmp.eq.s32.totalorder %s21, 0
      %p69 = por %p67, %p68
      %s71 = sadd.s32 %s70, 1
      %p74 = scmp.eq.s32.totalorder %s15, 1
      %p75 = scmp.ne.s32.totalorder %s70, %s72
      %p76 = scmp.eq.s32.totalorder %s15, 0
      %p77 = por %p75, %p76
      %p78 = scmp.ne.s32.totalorder %s70, %s72
      %p79 = scmp.eq.s32.totalorder %s20, 1
      %p80 = por %p78, %p79
      %p81 = scmp.ne.s32.totalorder %s72, %s73
      %p82 = scmp.eq.s32.totalorder %s20, 0
      %p83 = por %p81, %p82
      %p84 = scmp.ne.s32.totalorder %s72, %s73
      %p85 = scmp.eq.s32.totalorder %s21, 1
      %p86 = por %p84, %p85
      %p88 = scmp.ne.s32.totalorder %s73, %s87
      %p89 = scmp.eq.s32.totalorder %s21, 0
      %p90 = por %p88, %p89
      %s92 = sadd.s32 %s91, 1
      %p95 = scmp.eq.s32.totalorder %s15, 1
      %p96 = scmp.ne.s32.totalorder %s91, %s93
      %p97 = scmp.eq.s32.totalorder %s15, 0
      %p98 = por %p96, %p97
      %p99 = scmp.ne.s32.totalorder %s91, %s93
      %p100 = scmp.eq.s32.totalorder %s20, 1
      %p101 = por %p99, %p100
      %p102 = scmp.ne.s32.totalorder %s93, %s94
      %p103 = scmp.eq.s32.totalorder %s20, 0
      %p104 = por %p102, %p103
      %p105 = scmp.ne.s32.totalorder %s93, %s94
      %p106 = scmp.eq.s32.totalorder %s21, 1
      %p107 = por %p105, %p106
      %p109 = scmp.ne.s32.totalorder %s94, %s108
      %p110 = scmp.eq.s32.totalorder %s21, 0
      %p111 = por %p109, %p110
      %s113 = sadd.s32 %s112, 1
      %p116 = scmp.eq.s32.totalorder %s15, 1
      %p117 = scmp.ne.s32.totalorder %s112, %s114
      %p118 = scmp.eq.s32.totalorder %s15, 0
      %p119 = por %p117, %p118
      %p120 = scmp.ne.s32.totalorder %s112, %s114
      %p121 = scmp.eq.s32.totalorder %s20, 1
      %p122 = por %p120, %p121
      %p123 = scmp.ne.s32.totalorder %s114, %s115
      %p124 = scmp.eq.s32.totalorder %s20, 0
      %p125 = por %p123, %p124
      %p126 = scmp.ne.s32.totalorder %s114, %s115
      %p127 = scmp.eq.s32.totalorder %s21, 1
      %p128 = por %p126, %p127
      %p130 = scmp.ne.s32.totalorder %s115, %s129
      %p131 = scmp.eq.s32.totalorder %s21, 0
      %p132 = por %p130, %p131
      %s134 = sadd.s32 %s133, 1
      %p137 = scmp.eq.s32.totalorder %s15, 1
      %p138 = scmp.ne.s32.totalorder %s133, %s135
      %p139 = scmp.eq.s32.totalorder %s15, 0
      %p140 = por %p138, %p139
      %p141 = scmp.ne.s32.totalorder %s133, %s135
      %p142 = scmp.eq.s32.totalorder %s20, 1
      %p143 = por %p141, %p142
      %p144 = scmp.ne.s32.totalorder %s135, %s136
      %p145 = scmp.eq.s32.totalorder %s20, 0
      %p146 = por %p144, %p145
      %p147 = scmp.ne.s32.totalorder %s135, %s136
      %p148 = scmp.eq.s32.totalorder %s21, 1
      %p149 = por %p147, %p148
      %p151 = scmp.ne.s32.totalorder %s136, %s150
      %p152 = scmp.eq.s32.totalorder %s21, 0
      %p153 = por %p151, %p152
      %s154 = ssub.s32 %s15, %s22
      %p155 = scmp.eq.s32.totalorder %s154, 0
      %s157 = sadd.s32 %s156, 1
      %s158 = scalar_select %p155, %s156, %s157
      %p161 = pneg %p155
      %p162 = scmp.eq.s32.totalorder %s15, 1
      %p163 = por %p161, %p162
      %p164 = scmp.ne.s32.totalorder %s156, %s159
      %p165 = scmp.eq.s32.totalorder %s15, 0
      %p166 = por %p164, %p165
      %p167 = scmp.ne.s32.totalorder %s156, %s159
      %p168 = scmp.eq.s32.totalorder %s20, 1
      %p169 = por %p167, %p168
      %p170 = scmp.ne.s32.totalorder %s159, %s160
      %p171 = scmp.eq.s32.totalorder %s20, 0
      %p172 = por %p170, %p171
      %p173 = scmp.ne.s32.totalorder %s159, %s160
      %p174 = scmp.eq.s32.totalorder %s21, 1
      %p175 = por %p173, %p174
      %p177 = scmp.ne.s32.totalorder %s160, %s176
      %p178 = scmp.eq.s32.totalorder %s21, 0
      %p179 = por %p177, %p178
      %p180 = scmp.le.s32.totalorder 1, %s15
      %p181 = scmp.lt.s32.totalorder %s15, 3
      %p182 = pnand %p180, %p181
      %p183 = pneg %p182
      // Predicated region
      $region9: #{tpu_custom_call.1} parent=5 // pred_check
        _
      $region10: #{tpu_custom_call.1} parent=5 // pred_check_branch
        %185 = sbr.rel (%p182) target = $region12
      $region11: #{tpu_custom_call.1} parent=5 // pred_region
        %s186 = ssub.s32 %s15, 1
        // Predicated region
        $region13: #{tpu_custom_call.1} parent=11 // pred_check
          %p187 = pneg %p62
        $region14: #{tpu_custom_call.1} parent=11 // pred_check_branch
          %189 = sbr.rel (%p187) target = $region16
        $region15: #{tpu_custom_call.1} parent=11 // pred_region
          _
        $region16: #{tpu_custom_call.1} parent=11 // pred_fallthru
          _
        // Predicated region
        $region17: #{tpu_custom_call.1} parent=11 // pred_check
          %p190 = pneg %p83
        $region18: #{tpu_custom_call.1} parent=11 // pred_check_branch
          %192 = sbr.rel (%p190) target = $region20
        $region19: #{tpu_custom_call.1} parent=11 // pred_region
          _
        $region20: #{tpu_custom_call.1} parent=11 // pred_fallthru
          _
        // Predicated region
        $region21: #{tpu_custom_call.1} parent=11 // pred_check
          %p193 = pneg %p104
        $region22: #{tpu_custom_call.1} parent=11 // pred_check_branch
          %195 = sbr.rel (%p193) target = $region24
        $region23: #{tpu_custom_call.1} parent=11 // pred_region
          _
        $region24: #{tpu_custom_call.1} parent=11 // pred_fallthru
          _
        // Predicated region
        $region25: #{tpu_custom_call.1} parent=11 // pred_check
          %p196 = pneg %p125
        $region26: #{tpu_custom_call.1} parent=11 // pred_check_branch
          %198 = sbr.rel (%p196) target = $region28
        $region27: #{tpu_custom_call.1} parent=11 // pred_region
          _
        $region28: #{tpu_custom_call.1} parent=11 // pred_fallthru
          _
        // Predicated region
        $region29: #{tpu_custom_call.1} parent=11 // pred_check
          %p199 = pneg %p146
        $region30: #{tpu_custom_call.1} parent=11 // pred_check_branch
          %201 = sbr.rel (%p199) target = $region32
        $region31: #{tpu_custom_call.1} parent=11 // pred_region
          _
        $region32: #{tpu_custom_call.1} parent=11 // pred_fallthru
          _
      $region12: #{tpu_custom_call.1} parent=5 // pred_fallthru
        _
      %p202 = scmp.lt.s32.totalorder %s15, 2
      // Predicated region
      $region33: #{tpu_custom_call.1} parent=5 // pred_check
        %p203 = pneg %p202
      $region34: #{tpu_custom_call.1} parent=5 // pred_check_branch
        %205 = sbr.rel (%p203) target = $region36
      $region35: #{tpu_custom_call.1} parent=5 // pred_region
        // Predicated region
        $region37: #{tpu_custom_call.1} parent=35 // pred_check
          %p206 = pneg %p35
        $region38: #{tpu_custom_call.1} parent=35 // pred_check_branch
          %208 = sbr.rel (%p206) target = $region40
        $region39: #{tpu_custom_call.1} parent=35 // pred_region
          %p209 = scmp.lt.s32.totalorder %s15, 1
          %s210 = scalar_select %p209, %s15, 1
          %s211 = smul.addr %s210, 4
          %s212 = smul.addr %s211, 8
          %s213 = scalar_lea.vmem %s0, %s212
        $region40: #{tpu_custom_call.1} parent=35 // pred_fallthru
          _
      $region36: #{tpu_custom_call.1} parent=5 // pred_fallthru
        _
      %p214 = scmp.le.s32.totalorder 1, %s15
      %p215 = scmp.lt.s32.totalorder %s15, 3
      %p216 = pnand %p214, %p215
      %p217 = pneg %p216
      // Predicated region
      $region41: #{tpu_custom_call.1} parent=5 // pred_check
        _
      $region42: #{tpu_custom_call.1} parent=5 // pred_check_branch
        %219 = sbr.rel (%p216) target = $region44
      $region43: #{tpu_custom_call.1} parent=5 // pred_region
        %s220 = ssub.s32 %s15, 1
        %p221 = scmp.lt.s32.totalorder %s20, 1
        %s222 = scalar_select %p221, %s20, 1
        %s223 = smul.addr %s222, 4
        %s224 = smul.addr %s223, 8
        %s225 = scalar_lea.vmem %s0, %s224
        %p226 = pneg %p41
        %p227 = pneg %p38
        %p228 = pneg %p62
        %p229 = pneg %p59
        %p230 = pneg %p83
        %p231 = pneg %p80
        %p232 = pneg %p104
        %p233 = pneg %p101
        %p234 = pneg %p125
        %p235 = pneg %p122
        %p236 = pneg %p146
        %p237 = pneg %p143
        %p238 = pneg %p172
        %p239 = pneg %p169
        %s240 = sand.u32 %s159, 1
        %s241 = scalar_lea.sflag [#allocation3], %s240
        %s242 = sand.u32 %s159, 1
        %s243 = smul.addr %s242, 12
        %s244 = scalar_lea.vmem [#allocation2], %s243
        %p245 = scmp.lt.s32.totalorder %s20, 1
        %s246 = scalar_select %p245, %s20, 1
        %s247 = smul.addr %s246, 4
        %s248 = smul.addr %s247, 8
        %s249 = scalar_lea.vmem %s0, %s248
        %v250 = vld [vmem:[%s249] sm:$0xff]
        %v251 = vld [vmem:[%s249 + $0x8] sm:$0xff]
        %v252 = vld [vmem:[%s249 + $0x10] sm:$0xff]
        %v253 = vld [vmem:[%s1] sm:$0xf]
        %v254 = vld [vmem:[%s249 + $0x18] sm:$0xff]
        %s255 = scalar_lea.vmem %s1, 4
        %v256 = vld [vmem:[%s255] sm:$0xf]
        %261 = vrot.lane.b32.xlu0 %v250, 127
        %v262 = vpop.permute.xlu0 %261
        %263 = vrot.lane.b32.xlu0 %v251, 127
        %v264 = vpop.permute.xlu0 %263
        %265 = vrot.lane.b32.xlu0 %v252, 127
        %v266 = vpop.permute.xlu0 %265
        %267 = vrot.lane.b32.xlu0 %v254, 127
        %v268 = vpop.permute.xlu0 %267
        %vm269 = vcmask 1039360
        %v270 = vsel %vm269, %v262, %v264
        %v271 = vsel %vm269, %v264, %v266
        %v272 = vsel %vm269, %v266, %v268
        %vm276 = vcmask 64512
        %v278 = vsel %vm276, %v256, 0
        %280 = vmatprep.subr.mxu0 0.0
        %281 = vmatpush1.msra.mxu0 0.0
        %282 = vmatprep.subr.mxu0 0.0
        %283 = vmatpush1.msra.mxu0 0.0
        %284 = vmatprep.subr.mxu0 0.0
        %285 = vmatpush1.msra.mxu0 0.0
        %286 = vmatprep.subr.mxu0 0.0
        %287 = vmatpush1.msra.mxu0 0.0
        %288 = vmatprep.subr.mxu0 0.0
        %289 = vmatpush1.msra.mxu0 0.0
        %290 = vmatprep.subr.mxu0 0.0
        %291 = vmatpush1.msra.mxu0 0.0
        %292 = vmatprep.subr.mxu0 0.0
        %293 = vmatpush1.msra.mxu0 0.0
        %294 = vmatprep.subr.mxu0 0.0
        %295 = vmatpush1.msra.mxu0 0.0
        %296 = vmatprep.subr.mxu0 0.0
        %297 = vmatpush1.msra.mxu0 0.0
        %298 = vmatprep.subr.mxu0 0.0
        %299 = vmatpush1.msra.mxu0 0.0
        %300 = vmatprep.subr.mxu0 0.0
        %301 = vmatpush1.msra.mxu0 0.0
        %302 = vmatprep.subr.mxu0 0.0
        %303 = vmatpush1.msra.mxu0 0.0
        %304 = vmatprep.subr.mxu0 0.0
        %305 = vmatpush1.msra.mxu0 0.0
        %306 = vmatprep.subr.mxu0 0.0
        %307 = vmatpush1.msra.mxu0 0.0
        %308 = vmatprep.subr.mxu0 0.0
        %309 = vmatpush1.msra.mxu0 0.0
        %310 = vmatprep.subr.mxu0 %v271
        %311 = vmatpush1.msra.mxu0 %v270
        %312 = vmatprep.subr.mxu0 0.0
        %313 = vmatpush2.msra.mxu0 0.0
        %314 = vmatprep.subr.mxu0 0.0
        %315 = vmatpush2.msra.mxu0 0.0
        %316 = vmatprep.subr.mxu0 0.0
        %317 = vmatpush2.msra.mxu0 0.0
        %318 = vmatprep.subr.mxu0 0.0
        %319 = vmatpush2.msra.mxu0 0.0
        %320 = vmatprep.subr.mxu0 0.0
        %321 = vmatpush2.msra.mxu0 0.0
        %322 = vmatprep.subr.mxu0 0.0
        %323 = vmatpush2.msra.mxu0 0.0
        %324 = vmatprep.subr.mxu0 0.0
        %325 = vmatpush2.msra.mxu0 0.0
        %326 = vmatprep.subr.mxu0 0.0
        %327 = vmatpush2.msra.mxu0 0.0
        %328 = vmatprep.subr.mxu0 0.0
        %329 = vmatpush2.msra.mxu0 0.0
        %330 = vmatprep.subr.mxu0 0.0
        %331 = vmatpush2.msra.mxu0 0.0
        %332 = vmatprep.subr.mxu0 0.0
        %333 = vmatpush2.msra.mxu0 0.0
        %334 = vmatprep.subr.mxu0 0.0
        %335 = vmatpush2.msra.mxu0 0.0
        %336 = vmatprep.subr.mxu0 0.0
        %337 = vmatpush2.msra.mxu0 0.0
        %338 = vmatprep.subr.mxu0 0.0
        %339 = vmatpush2.msra.mxu0 0.0
        %340 = vmatprep.subr.mxu0 0.0
        %341 = vmatpush2.msra.mxu0 0.0
        %342 = vmatprep.subr.mxu0 0.0
        %343 = vmatpush2.msra.mxu0 0.0
        %344 = vmatprep.mubr.f32.mxu0 0.0
        %345 = vmatmul.mubr.f32.gmra.mxu0 %v278
        %v346 = vpop.f32.mrf.mxu0
        %v347 = vadd.f32 0.0, %v346
        %v348 = vpop.f32.mrf.mxu0
        %v349 = vadd.f32 0.0, %v348
        %350 = vdwg.mxu0
        %351 = vmatprep.subr.mxu0 0.0
        %352 = vmatpush1.msra.mxu0 0.0
        %353 = vmatprep.subr.mxu0 0.0
        %354 = vmatpush1.msra.mxu0 0.0
        %355 = vmatprep.subr.mxu0 0.0
        %356 = vmatpush1.msra.mxu0 0.0
        %357 = vmatprep.subr.mxu0 0.0
        %358 = vmatpush1.msra.mxu0 0.0
        %359 = vmatprep.subr.mxu0 0.0
        %360 = vmatpush1.msra.mxu0 0.0
        %361 = vmatprep.subr.mxu0 0.0
        %362 = vmatpush1.msra.mxu0 0.0
        %363 = vmatprep.subr.mxu0 0.0
        %364 = vmatpush1.msra.mxu0 0.0
        %365 = vmatprep.subr.mxu0 0.0
        %366 = vmatpush1.msra.mxu0 0.0
        %367 = vmatprep.subr.mxu0 0.0
        %368 = vmatpush1.msra.mxu0 0.0
        %369 = vmatprep.subr.mxu0 0.0
        %370 = vmatpush1.msra.mxu0 0.0
        %371 = vmatprep.subr.mxu0 0.0
        %372 = vmatpush1.msra.mxu0 0.0
        %373 = vmatprep.subr.mxu0 0.0
        %374 = vmatpush1.msra.mxu0 0.0
        %375 = vmatprep.subr.mxu0 0.0
        %376 = vmatpush1.msra.mxu0 0.0
        %377 = vmatprep.subr.mxu0 0.0
        %378 = vmatpush1.msra.mxu0 0.0
        %379 = vmatprep.subr.mxu0 0.0
        %380 = vmatpush1.msra.mxu0 0.0
        %381 = vmatprep.subr.mxu0 0.0
        %382 = vmatpush1.msra.mxu0 %v272
        %383 = vmatprep.subr.mxu0 0.0
        %384 = vmatpush2.msra.mxu0 0.0
        %385 = vmatprep.subr.mxu0 0.0
        %386 = vmatpush2.msra.mxu0 0.0
        %387 = vmatprep.subr.mxu0 0.0
        %388 = vmatpush2.msra.mxu0 0.0
        %389 = vmatprep.subr.mxu0 0.0
        %390 = vmatpush2.msra.mxu0 0.0
        %391 = vmatprep.subr.mxu0 0.0
        %392 = vmatpush2.msra.mxu0 0.0
        %393 = vmatprep.subr.mxu0 0.0
        %394 = vmatpush2.msra.mxu0 0.0
        %395 = vmatprep.subr.mxu0 0.0
        %396 = vmatpush2.msra.mxu0 0.0
        %397 = vmatprep.subr.mxu0 0.0
        %398 = vmatpush2.msra.mxu0 0.0
        %399 = vmatprep.subr.mxu0 0.0
        %400 = vmatpush2.msra.mxu0 0.0
        %401 = vmatprep.subr.mxu0 0.0
        %402 = vmatpush2.msra.mxu0 0.0
        %403 = vmatprep.subr.mxu0 0.0
        %404 = vmatpush2.msra.mxu0 0.0
        %405 = vmatprep.subr.mxu0 0.0
        %406 = vmatpush2.msra.mxu0 0.0
        %407 = vmatprep.subr.mxu0 0.0
        %408 = vmatpush2.msra.mxu0 0.0
        %409 = vmatprep.subr.mxu0 0.0
        %410 = vmatpush2.msra.mxu0 0.0
        %411 = vmatprep.subr.mxu0 0.0
        %412 = vmatpush2.msra.mxu0 0.0
        %413 = vmatprep.subr.mxu0 0.0
        %414 = vmatpush2.msra.mxu0 0.0
        %415 = vmatprep.mubr.f32.mxu0 0.0
        %416 = vmatmul.mubr.f32.gmra.mxu0 %v278
        %v417 = vpop.f32.mrf.mxu0
        %v418 = vadd.f32 0.0, %v417
        %v419 = vpop.f32.mrf.mxu0
        %420 = vdwg.mxu0
        %v422 = vsel %vm276, %v253, 0
        %424 = vmatprep.subr.mxu0 0.0
        %425 = vmatpush1.msra.mxu0 0.0
        %426 = vmatprep.subr.mxu0 0.0
        %427 = vmatpush1.msra.mxu0 0.0
        %428 = vmatprep.subr.mxu0 0.0
        %429 = vmatpush1.msra.mxu0 0.0
        %430 = vmatprep.subr.mxu0 0.0
        %431 = vmatpush1.msra.mxu0 0.0
        %432 = vmatprep.subr.mxu0 0.0
        %433 = vmatpush1.msra.mxu0 0.0
        %434 = vmatprep.subr.mxu0 0.0
        %435 = vmatpush1.msra.mxu0 0.0
        %436 = vmatprep.subr.mxu0 0.0
        %437 = vmatpush1.msra.mxu0 0.0
        %438 = vmatprep.subr.mxu0 0.0
        %439 = vmatpush1.msra.mxu0 0.0
        %440 = vmatprep.subr.mxu0 0.0
        %441 = vmatpush1.msra.mxu0 0.0
        %442 = vmatprep.subr.mxu0 0.0
        %443 = vmatpush1.msra.mxu0 0.0
        %444 = vmatprep.subr.mxu0 0.0
        %445 = vmatpush1.msra.mxu0 0.0
        %446 = vmatprep.subr.mxu0 0.0
        %447 = vmatpush1.msra.mxu0 0.0
        %448 = vmatprep.subr.mxu0 0.0
        %449 = vmatpush1.msra.mxu0 0.0
        %450 = vmatprep.subr.mxu0 0.0
        %451 = vmatpush1.msra.mxu0 0.0
        %452 = vmatprep.subr.mxu0 0.0
        %453 = vmatpush1.msra.mxu0 0.0
        %454 = vmatprep.subr.mxu0 %v251
        %455 = vmatpush1.msra.mxu0 %v250
        %456 = vmatprep.subr.mxu0 0.0
        %457 = vmatpush2.msra.mxu0 0.0
        %458 = vmatprep.subr.mxu0 0.0
        %459 = vmatpush2.msra.mxu0 0.0
        %460 = vmatprep.subr.mxu0 0.0
        %461 = vmatpush2.msra.mxu0 0.0
        %462 = vmatprep.subr.mxu0 0.0
        %463 = vmatpush2.msra.mxu0 0.0
        %464 = vmatprep.subr.mxu0 0.0
        %465 = vmatpush2.msra.mxu0 0.0
        %466 = vmatprep.subr.mxu0 0.0
        %467 = vmatpush2.msra.mxu0 0.0
        %468 = vmatprep.subr.mxu0 0.0
        %469 = vmatpush2.msra.mxu0 0.0
        %470 = vmatprep.subr.mxu0 0.0
        %471 = vmatpush2.msra.mxu0 0.0
        %472 = vmatprep.subr.mxu0 0.0
        %473 = vmatpush2.msra.mxu0 0.0
        %474 = vmatprep.subr.mxu0 0.0
        %475 = vmatpush2.msra.mxu0 0.0
        %476 = vmatprep.subr.mxu0 0.0
        %477 = vmatpush2.msra.mxu0 0.0
        %478 = vmatprep.subr.mxu0 0.0
        %479 = vmatpush2.msra.mxu0 0.0
        %480 = vmatprep.subr.mxu0 0.0
        %481 = vmatpush2.msra.mxu0 0.0
        %482 = vmatprep.subr.mxu0 0.0
        %483 = vmatpush2.msra.mxu0 0.0
        %484 = vmatprep.subr.mxu0 0.0
        %485 = vmatpush2.msra.mxu0 0.0
        %486 = vmatprep.subr.mxu0 0.0
        %487 = vmatpush2.msra.mxu0 0.0
        %488 = vmatprep.mubr.f32.mxu0 0.0
        %489 = vmatmul.mubr.f32.gmra.mxu0 %v422
        %v490 = vpop.f32.mrf.mxu0
        %v491 = vadd.f32 %v347, %v490
        %v492 = vpop.f32.mrf.mxu0
        %v493 = vadd.f32 %v349, %v492
        %494 = vdwg.mxu0
        %495 = vmatprep.subr.mxu0 0.0
        %496 = vmatpush1.msra.mxu0 0.0
        %497 = vmatprep.subr.mxu0 0.0
        %498 = vmatpush1.msra.mxu0 0.0
        %499 = vmatprep.subr.mxu0 0.0
        %500 = vmatpush1.msra.mxu0 0.0
        %501 = vmatprep.subr.mxu0 0.0
        %502 = vmatpush1.msra.mxu0 0.0
        %503 = vmatprep.subr.mxu0 0.0
        %504 = vmatpush1.msra.mxu0 0.0
        %505 = vmatprep.subr.mxu0 0.0
        %506 = vmatpush1.msra.mxu0 0.0
        %507 = vmatprep.subr.mxu0 0.0
        %508 = vmatpush1.msra.mxu0 0.0
        %509 = vmatprep.subr.mxu0 0.0
        %510 = vmatpush1.msra.mxu0 0.0
        %511 = vmatprep.subr.mxu0 0.0
        %512 = vmatpush1.msra.mxu0 0.0
        %513 = vmatprep.subr.mxu0 0.0
        %514 = vmatpush1.msra.mxu0 0.0
        %515 = vmatprep.subr.mxu0 0.0
        %516 = vmatpush1.msra.mxu0 0.0
        %517 = vmatprep.subr.mxu0 0.0
        %518 = vmatpush1.msra.mxu0 0.0
        %519 = vmatprep.subr.mxu0 0.0
        %520 = vmatpush1.msra.mxu0 0.0
        %521 = vmatprep.subr.mxu0 0.0
        %522 = vmatpush1.msra.mxu0 0.0
        %523 = vmatprep.subr.mxu0 0.0
        %524 = vmatpush1.msra.mxu0 0.0
        %525 = vmatprep.subr.mxu0 0.0
        %526 = vmatpush1.msra.mxu0 %v252
        %527 = vmatprep.subr.mxu0 0.0
        %528 = vmatpush2.msra.mxu0 0.0
        %529 = vmatprep.subr.mxu0 0.0
        %530 = vmatpush2.msra.mxu0 0.0
        %531 = vmatprep.subr.mxu0 0.0
        %532 = vmatpush2.msra.mxu0 0.0
        %533 = vmatprep.subr.mxu0 0.0
        %534 = vmatpush2.msra.mxu0 0.0
        %535 = vmatprep.subr.mxu0 0.0
        %536 = vmatpush2.msra.mxu0 0.0
        %537 = vmatprep.subr.mxu0 0.0
        %538 = vmatpush2.msra.mxu0 0.0
        %539 = vmatprep.subr.mxu0 0.0
        %540 = vmatpush2.msra.mxu0 0.0
        %541 = vmatprep.subr.mxu0 0.0
        %542 = vmatpush2.msra.mxu0 0.0
        %543 = vmatprep.subr.mxu0 0.0
        %544 = vmatpush2.msra.mxu0 0.0
        %545 = vmatprep.subr.mxu0 0.0
        %546 = vmatpush2.msra.mxu0 0.0
        %547 = vmatprep.subr.mxu0 0.0
        %548 = vmatpush2.msra.mxu0 0.0
        %549 = vmatprep.subr.mxu0 0.0
        %550 = vmatpush2.msra.mxu0 0.0
        %551 = vmatprep.subr.mxu0 0.0
        %552 = vmatpush2.msra.mxu0 0.0
        %553 = vmatprep.subr.mxu0 0.0
        %554 = vmatpush2.msra.mxu0 0.0
        %555 = vmatprep.subr.mxu0 0.0
        %556 = vmatpush2.msra.mxu0 0.0
        %557 = vmatprep.subr.mxu0 0.0
        %558 = vmatpush2.msra.mxu0 0.0
        %559 = vmatprep.mubr.f32.mxu0 0.0
        %560 = vmatmul.mubr.f32.gmra.mxu0 %v422
        %v561 = vpop.f32.mrf.mxu0
        %v562 = vadd.f32 %v418, %v561
        %v563 = vpop.f32.mrf.mxu0
        %564 = vdwg.mxu0
        %s565 = scalar_lea.vmem %s1, 8
        %v566 = vld [vmem:[%s565] sm:$0xf]
        %567 = vrot.lane.b32.xlu0 %v250, 126
        %v568 = vpop.permute.xlu0 %567
        %569 = vrot.lane.b32.xlu0 %v251, 126
        %v570 = vpop.permute.xlu0 %569
        %571 = vrot.lane.b32.xlu0 %v252, 126
        %v572 = vpop.permute.xlu0 %571
        %573 = vrot.lane.b32.xlu0 %v254, 126
        %v574 = vpop.permute.xlu0 %573
        %vm575 = vcmask 1031168
        %v576 = vsel %vm575, %v568, %v570
        %v577 = vsel %vm575, %v570, %v572
        %v578 = vsel %vm575, %v572, %v574
        %v583 = vsel %vm276, %v566, 0
        %585 = vmatprep.subr.mxu0 0.0
        %586 = vmatpush1.msra.mxu0 0.0
        %587 = vmatprep.subr.mxu0 0.0
        %588 = vmatpush1.msra.mxu0 0.0
        %589 = vmatprep.subr.mxu0 0.0
        %590 = vmatpush1.msra.mxu0 0.0
        %591 = vmatprep.subr.mxu0 0.0
        %592 = vmatpush1.msra.mxu0 0.0
        %593 = vmatprep.subr.mxu0 0.0
        %594 = vmatpush1.msra.mxu0 0.0
        %595 = vmatprep.subr.mxu0 0.0
        %596 = vmatpush1.msra.mxu0 0.0
        %597 = vmatprep.subr.mxu0 0.0
        %598 = vmatpush1.msra.mxu0 0.0
        %599 = vmatprep.subr.mxu0 0.0
        %600 = vmatpush1.msra.mxu0 0.0
        %601 = vmatprep.subr.mxu0 0.0
        %602 = vmatpush1.msra.mxu0 0.0
        %603 = vmatprep.subr.mxu0 0.0
        %604 = vmatpush1.msra.mxu0 0.0
        %605 = vmatprep.subr.mxu0 0.0
        %606 = vmatpush1.msra.mxu0 0.0
        %607 = vmatprep.subr.mxu0 0.0
        %608 = vmatpush1.msra.mxu0 0.0
        %609 = vmatprep.subr.mxu0 0.0
        %610 = vmatpush1.msra.mxu0 0.0
        %611 = vmatprep.subr.mxu0 0.0
        %612 = vmatpush1.msra.mxu0 0.0
        %613 = vmatprep.subr.mxu0 0.0
        %614 = vmatpush1.msra.mxu0 0.0
        %615 = vmatprep.subr.mxu0 %v577
        %616 = vmatpush1.msra.mxu0 %v576
        %617 = vmatprep.subr.mxu0 0.0
        %618 = vmatpush2.msra.mxu0 0.0
        %619 = vmatprep.subr.mxu0 0.0
        %620 = vmatpush2.msra.mxu0 0.0
        %621 = vmatprep.subr.mxu0 0.0
        %622 = vmatpush2.msra.mxu0 0.0
        %623 = vmatprep.subr.mxu0 0.0
        %624 = vmatpush2.msra.mxu0 0.0
        %625 = vmatprep.subr.mxu0 0.0
        %626 = vmatpush2.msra.mxu0 0.0
        %627 = vmatprep.subr.mxu0 0.0
        %628 = vmatpush2.msra.mxu0 0.0
        %629 = vmatprep.subr.mxu0 0.0
        %630 = vmatpush2.msra.mxu0 0.0
        %631 = vmatprep.subr.mxu0 0.0
        %632 = vmatpush2.msra.mxu0 0.0
        %633 = vmatprep.subr.mxu0 0.0
        %634 = vmatpush2.msra.mxu0 0.0
        %635 = vmatprep.subr.mxu0 0.0
        %636 = vmatpush2.msra.mxu0 0.0
        %637 = vmatprep.subr.mxu0 0.0
        %638 = vmatpush2.msra.mxu0 0.0
        %639 = vmatprep.subr.mxu0 0.0
        %640 = vmatpush2.msra.mxu0 0.0
        %641 = vmatprep.subr.mxu0 0.0
        %642 = vmatpush2.msra.mxu0 0.0
        %643 = vmatprep.subr.mxu0 0.0
        %644 = vmatpush2.msra.mxu0 0.0
        %645 = vmatprep.subr.mxu0 0.0
        %646 = vmatpush2.msra.mxu0 0.0
        %647 = vmatprep.subr.mxu0 0.0
        %648 = vmatpush2.msra.mxu0 0.0
        %649 = vmatprep.mubr.f32.mxu0 0.0
        %650 = vmatmul.mubr.f32.gmra.mxu0 %v583
        %v651 = vpop.f32.mrf.mxu0
        %v652 = vadd.f32 0.0, %v651
        %v653 = vpop.f32.mrf.mxu0
        %v654 = vadd.f32 0.0, %v653
        %655 = vdwg.mxu0
        %656 = vmatprep.subr.mxu0 0.0
        %657 = vmatpush1.msra.mxu0 0.0
        %658 = vmatprep.subr.mxu0 0.0
        %659 = vmatpush1.msra.mxu0 0.0
        %660 = vmatprep.subr.mxu0 0.0
        %661 = vmatpush1.msra.mxu0 0.0
        %662 = vmatprep.subr.mxu0 0.0
        %663 = vmatpush1.msra.mxu0 0.0
        %664 = vmatprep.subr.mxu0 0.0
        %665 = vmatpush1.msra.mxu0 0.0
        %666 = vmatprep.subr.mxu0 0.0
        %667 = vmatpush1.msra.mxu0 0.0
        %668 = vmatprep.subr.mxu0 0.0
        %669 = vmatpush1.msra.mxu0 0.0
        %670 = vmatprep.subr.mxu0 0.0
        %671 = vmatpush1.msra.mxu0 0.0
        %672 = vmatprep.subr.mxu0 0.0
        %673 = vmatpush1.msra.mxu0 0.0
        %674 = vmatprep.subr.mxu0 0.0
        %675 = vmatpush1.msra.mxu0 0.0
        %676 = vmatprep.subr.mxu0 0.0
        %677 = vmatpush1.msra.mxu0 0.0
        %678 = vmatprep.subr.mxu0 0.0
        %679 = vmatpush1.msra.mxu0 0.0
        %680 = vmatprep.subr.mxu0 0.0
        %681 = vmatpush1.msra.mxu0 0.0
        %682 = vmatprep.subr.mxu0 0.0
        %683 = vmatpush1.msra.mxu0 0.0
        %684 = vmatprep.subr.mxu0 0.0
        %685 = vmatpush1.msra.mxu0 0.0
        %686 = vmatprep.subr.mxu0 0.0
        %687 = vmatpush1.msra.mxu0 %v578
        %688 = vmatprep.subr.mxu0 0.0
        %689 = vmatpush2.msra.mxu0 0.0
        %690 = vmatprep.subr.mxu0 0.0
        %691 = vmatpush2.msra.mxu0 0.0
        %692 = vmatprep.subr.mxu0 0.0
        %693 = vmatpush2.msra.mxu0 0.0
        %694 = vmatprep.subr.mxu0 0.0
        %695 = vmatpush2.msra.mxu0 0.0
        %696 = vmatprep.subr.mxu0 0.0
        %697 = vmatpush2.msra.mxu0 0.0
        %698 = vmatprep.subr.mxu0 0.0
        %699 = vmatpush2.msra.mxu0 0.0
        %700 = vmatprep.subr.mxu0 0.0
        %701 = vmatpush2.msra.mxu0 0.0
        %702 = vmatprep.subr.mxu0 0.0
        %703 = vmatpush2.msra.mxu0 0.0
        %704 = vmatprep.subr.mxu0 0.0
        %705 = vmatpush2.msra.mxu0 0.0
        %706 = vmatprep.subr.mxu0 0.0
        %707 = vmatpush2.msra.mxu0 0.0
        %708 = vmatprep.subr.mxu0 0.0
        %709 = vmatpush2.msra.mxu0 0.0
        %710 = vmatprep.subr.mxu0 0.0
        %711 = vmatpush2.msra.mxu0 0.0
        %712 = vmatprep.subr.mxu0 0.0
        %713 = vmatpush2.msra.mxu0 0.0
        %714 = vmatprep.subr.mxu0 0.0
        %715 = vmatpush2.msra.mxu0 0.0
        %716 = vmatprep.subr.mxu0 0.0
        %717 = vmatpush2.msra.mxu0 0.0
        %718 = vmatprep.subr.mxu0 0.0
        %719 = vmatpush2.msra.mxu0 0.0
        %720 = vmatprep.mubr.f32.mxu0 0.0
        %721 = vmatmul.mubr.f32.gmra.mxu0 %v583
        %v722 = vpop.f32.mrf.mxu0
        %v723 = vadd.f32 0.0, %v722
        %v724 = vpop.f32.mrf.mxu0
        %725 = vdwg.mxu0
        %v726 = vadd.f32 %v491, %v652
        %v727 = vadd.f32 %v493, %v654
        %v728 = vadd.f32 %v562, %v723
        %s729 = scalar_lea.vmem %s1, 12
        %v730 = vld [vmem:[%s729] sm:$0xf]
        %731 = vrot.lane.b32.xlu0 %v250, 104
        %v732 = vpop.permute.xlu0 %731
        %733 = vrot.lane.b32.xlu0 %v251, 104
        %v734 = vpop.permute.xlu0 %733
        %735 = vrot.lane.b32.xlu0 %v252, 104
        %v736 = vpop.permute.xlu0 %735
        %737 = vrot.lane.b32.xlu0 %v254, 104
        %v738 = vpop.permute.xlu0 %737
        %vm739 = vcmask 850944
        %v740 = vsel %vm739, %v732, %v734
        %v741 = vsel %vm739, %v734, %v736
        %v742 = vsel %vm739, %v736, %v738
        %v747 = vsel %vm276, %v730, 0
        %749 = vmatprep.subr.mxu0 0.0
        %750 = vmatpush1.msra.mxu0 0.0
        %751 = vmatprep.subr.mxu0 0.0
        %752 = vmatpush1.msra.mxu0 0.0
        %753 = vmatprep.subr.mxu0 0.0
        %754 = vmatpush1.msra.mxu0 0.0
        %755 = vmatprep.subr.mxu0 0.0
        %756 = vmatpush1.msra.mxu0 0.0
        %757 = vmatprep.subr.mxu0 0.0
        %758 = vmatpush1.msra.mxu0 0.0
        %759 = vmatprep.subr.mxu0 0.0
        %760 = vmatpush1.msra.mxu0 0.0
        %761 = vmatprep.subr.mxu0 0.0
        %762 = vmatpush1.msra.mxu0 0.0
        %763 = vmatprep.subr.mxu0 0.0
        %764 = vmatpush1.msra.mxu0 0.0
        %765 = vmatprep.subr.mxu0 0.0
        %766 = vmatpush1.msra.mxu0 0.0
        %767 = vmatprep.subr.mxu0 0.0
        %768 = vmatpush1.msra.mxu0 0.0
        %769 = vmatprep.subr.mxu0 0.0
        %770 = vmatpush1.msra.mxu0 0.0
        %771 = vmatprep.subr.mxu0 0.0
        %772 = vmatpush1.msra.mxu0 0.0
        %773 = vmatprep.subr.mxu0 0.0
        %774 = vmatpush1.msra.mxu0 0.0
        %775 = vmatprep.subr.mxu0 0.0
        %776 = vmatpush1.msra.mxu0 0.0
        %777 = vmatprep.subr.mxu0 0.0
        %778 = vmatpush1.msra.mxu0 0.0
        %779 = vmatprep.subr.mxu0 %v741
        %780 = vmatpush1.msra.mxu0 %v740
        %781 = vmatprep.subr.mxu0 0.0
        %782 = vmatpush2.msra.mxu0 0.0
        %783 = vmatprep.subr.mxu0 0.0
        %784 = vmatpush2.msra.mxu0 0.0
        %785 = vmatprep.subr.mxu0 0.0
        %786 = vmatpush2.msra.mxu0 0.0
        %787 = vmatprep.subr.mxu0 0.0
        %788 = vmatpush2.msra.mxu0 0.0
        %789 = vmatprep.subr.mxu0 0.0
        %790 = vmatpush2.msra.mxu0 0.0
        %791 = vmatprep.subr.mxu0 0.0
        %792 = vmatpush2.msra.mxu0 0.0
        %793 = vmatprep.subr.mxu0 0.0
        %794 = vmatpush2.msra.mxu0 0.0
        %795 = vmatprep.subr.mxu0 0.0
        %796 = vmatpush2.msra.mxu0 0.0
        %797 = vmatprep.subr.mxu0 0.0
        %798 = vmatpush2.msra.mxu0 0.0
        %799 = vmatprep.subr.mxu0 0.0
        %800 = vmatpush2.msra.mxu0 0.0
        %801 = vmatprep.subr.mxu0 0.0
        %802 = vmatpush2.msra.mxu0 0.0
        %803 = vmatprep.subr.mxu0 0.0
        %804 = vmatpush2.msra.mxu0 0.0
        %805 = vmatprep.subr.mxu0 0.0
        %806 = vmatpush2.msra.mxu0 0.0
        %807 = vmatprep.subr.mxu0 0.0
        %808 = vmatpush2.msra.mxu0 0.0
        %809 = vmatprep.subr.mxu0 0.0
        %810 = vmatpush2.msra.mxu0 0.0
        %811 = vmatprep.subr.mxu0 0.0
        %812 = vmatpush2.msra.mxu0 0.0
        %813 = vmatprep.mubr.f32.mxu0 0.0
        %814 = vmatmul.mubr.f32.gmra.mxu0 %v747
        %v815 = vpop.f32.mrf.mxu0
        %v816 = vadd.f32 0.0, %v815
        %v817 = vpop.f32.mrf.mxu0
        %v818 = vadd.f32 0.0, %v817
        %819 = vdwg.mxu0
        %820 = vmatprep.subr.mxu0 0.0
        %821 = vmatpush1.msra.mxu0 0.0
        %822 = vmatprep.subr.mxu0 0.0
        %823 = vmatpush1.msra.mxu0 0.0
        %824 = vmatprep.subr.mxu0 0.0
        %825 = vmatpush1.msra.mxu0 0.0
        %826 = vmatprep.subr.mxu0 0.0
        %827 = vmatpush1.msra.mxu0 0.0
        %828 = vmatprep.subr.mxu0 0.0
        %829 = vmatpush1.msra.mxu0 0.0
        %830 = vmatprep.subr.mxu0 0.0
        %831 = vmatpush1.msra.mxu0 0.0
        %832 = vmatprep.subr.mxu0 0.0
        %833 = vmatpush1.msra.mxu0 0.0
        %834 = vmatprep.subr.mxu0 0.0
        %835 = vmatpush1.msra.mxu0 0.0
        %836 = vmatprep.subr.mxu0 0.0
        %837 = vmatpush1.msra.mxu0 0.0
        %838 = vmatprep.subr.mxu0 0.0
        %839 = vmatpush1.msra.mxu0 0.0
        %840 = vmatprep.subr.mxu0 0.0
        %841 = vmatpush1.msra.mxu0 0.0
        %842 = vmatprep.subr.mxu0 0.0
        %843 = vmatpush1.msra.mxu0 0.0
        %844 = vmatprep.subr.mxu0 0.0
        %845 = vmatpush1.msra.mxu0 0.0
        %846 = vmatprep.subr.mxu0 0.0
        %847 = vmatpush1.msra.mxu0 0.0
        %848 = vmatprep.subr.mxu0 0.0
        %849 = vmatpush1.msra.mxu0 0.0
        %850 = vmatprep.subr.mxu0 0.0
        %851 = vmatpush1.msra.mxu0 %v742
        %852 = vmatprep.subr.mxu0 0.0
        %853 = vmatpush2.msra.mxu0 0.0
        %854 = vmatprep.subr.mxu0 0.0
        %855 = vmatpush2.msra.mxu0 0.0
        %856 = vmatprep.subr.mxu0 0.0
        %857 = vmatpush2.msra.mxu0 0.0
        %858 = vmatprep.subr.mxu0 0.0
        %859 = vmatpush2.msra.mxu0 0.0
        %860 = vmatprep.subr.mxu0 0.0
        %861 = vmatpush2.msra.mxu0 0.0
        %862 = vmatprep.subr.mxu0 0.0
        %863 = vmatpush2.msra.mxu0 0.0
        %864 = vmatprep.subr.mxu0 0.0
        %865 = vmatpush2.msra.mxu0 0.0
        %866 = vmatprep.subr.mxu0 0.0
        %867 = vmatpush2.msra.mxu0 0.0
        %868 = vmatprep.subr.mxu0 0.0
        %869 = vmatpush2.msra.mxu0 0.0
        %870 = vmatprep.subr.mxu0 0.0
        %871 = vmatpush2.msra.mxu0 0.0
        %872 = vmatprep.subr.mxu0 0.0
        %873 = vmatpush2.msra.mxu0 0.0
        %874 = vmatprep.subr.mxu0 0.0
        %875 = vmatpush2.msra.mxu0 0.0
        %876 = vmatprep.subr.mxu0 0.0
        %877 = vmatpush2.msra.mxu0 0.0
        %878 = vmatprep.subr.mxu0 0.0
        %879 = vmatpush2.msra.mxu0 0.0
        %880 = vmatprep.subr.mxu0 0.0
        %881 = vmatpush2.msra.mxu0 0.0
        %882 = vmatprep.subr.mxu0 0.0
        %883 = vmatpush2.msra.mxu0 0.0
        %884 = vmatprep.mubr.f32.mxu0 0.0
        %885 = vmatmul.mubr.f32.gmra.mxu0 %v747
        %v886 = vpop.f32.mrf.mxu0
        %v887 = vadd.f32 0.0, %v886
        %v888 = vpop.f32.mrf.mxu0
        %889 = vdwg.mxu0
        %v890 = vadd.f32 %v726, %v816
        %v891 = vadd.f32 %v727, %v818
        %v892 = vadd.f32 %v728, %v887
        %s893 = scalar_lea.vmem %s1, 16
        %v894 = vld [vmem:[%s893] sm:$0xf]
        %895 = vrot.lane.b32.xlu0 %v250, 103
        %v896 = vpop.permute.xlu0 %895
        %897 = vrot.lane.b32.xlu0 %v251, 103
        %v898 = vpop.permute.xlu0 %897
        %899 = vrot.lane.b32.xlu0 %v252, 103
        %v900 = vpop.permute.xlu0 %899
        %901 = vrot.lane.b32.xlu0 %v254, 103
        %v902 = vpop.permute.xlu0 %901
        %vm903 = vcmask 842752
        %v904 = vsel %vm903, %v896, %v898
        %v905 = vsel %vm903, %v898, %v900
        %v906 = vsel %vm903, %v900, %v902
        %v911 = vsel %vm276, %v894, 0
        %913 = vmatprep.subr.mxu0 0.0
        %914 = vmatpush1.msra.mxu0 0.0
        %915 = vmatprep.subr.mxu0 0.0
        %916 = vmatpush1.msra.mxu0 0.0
        %917 = vmatprep.subr.mxu0 0.0
        %918 = vmatpush1.msra.mxu0 0.0
        %919 = vmatprep.subr.mxu0 0.0
        %920 = vmatpush1.msra.mxu0 0.0
        %921 = vmatprep.subr.mxu0 0.0
        %922 = vmatpush1.msra.mxu0 0.0
        %923 = vmatprep.subr.mxu0 0.0
        %924 = vmatpush1.msra.mxu0 0.0
        %925 = vmatprep.subr.mxu0 0.0
        %926 = vmatpush1.msra.mxu0 0.0
        %927 = vmatprep.subr.mxu0 0.0
        %928 = vmatpush1.msra.mxu0 0.0
        %929 = vmatprep.subr.mxu0 0.0
        %930 = vmatpush1.msra.mxu0 0.0
        %931 = vmatprep.subr.mxu0 0.0
        %932 = vmatpush1.msra.mxu0 0.0
        %933 = vmatprep.subr.mxu0 0.0
        %934 = vmatpush1.msra.mxu0 0.0
        %935 = vmatprep.subr.mxu0 0.0
        %936 = vmatpush1.msra.mxu0 0.0
        %937 = vmatprep.subr.mxu0 0.0
        %938 = vmatpush1.msra.mxu0 0.0
        %939 = vmatprep.subr.mxu0 0.0
        %940 = vmatpush1.msra.mxu0 0.0
        %941 = vmatprep.subr.mxu0 0.0
        %942 = vmatpush1.msra.mxu0 0.0
        %943 = vmatprep.subr.mxu0 %v905
        %944 = vmatpush1.msra.mxu0 %v904
        %945 = vmatprep.subr.mxu0 0.0
        %946 = vmatpush2.msra.mxu0 0.0
        %947 = vmatprep.subr.mxu0 0.0
        %948 = vmatpush2.msra.mxu0 0.0
        %949 = vmatprep.subr.mxu0 0.0
        %950 = vmatpush2.msra.mxu0 0.0
        %951 = vmatprep.subr.mxu0 0.0
        %952 = vmatpush2.msra.mxu0 0.0
        %953 = vmatprep.subr.mxu0 0.0
        %954 = vmatpush2.msra.mxu0 0.0
        %955 = vmatprep.subr.mxu0 0.0
        %956 = vmatpush2.msra.mxu0 0.0
        %957 = vmatprep.subr.mxu0 0.0
        %958 = vmatpush2.msra.mxu0 0.0
        %959 = vmatprep.subr.mxu0 0.0
        %960 = vmatpush2.msra.mxu0 0.0
        %961 = vmatprep.subr.mxu0 0.0
        %962 = vmatpush2.msra.mxu0 0.0
        %963 = vmatprep.subr.mxu0 0.0
        %964 = vmatpush2.msra.mxu0 0.0
        %965 = vmatprep.subr.mxu0 0.0
        %966 = vmatpush2.msra.mxu0 0.0
        %967 = vmatprep.subr.mxu0 0.0
        %968 = vmatpush2.msra.mxu0 0.0
        %969 = vmatprep.subr.mxu0 0.0
        %970 = vmatpush2.msra.mxu0 0.0
        %971 = vmatprep.subr.mxu0 0.0
        %972 = vmatpush2.msra.mxu0 0.0
        %973 = vmatprep.subr.mxu0 0.0
        %974 = vmatpush2.msra.mxu0 0.0
        %975 = vmatprep.subr.mxu0 0.0
        %976 = vmatpush2.msra.mxu0 0.0
        %977 = vmatprep.mubr.f32.mxu0 0.0
        %978 = vmatmul.mubr.f32.gmra.mxu0 %v911
        %v979 = vpop.f32.mrf.mxu0
        %v980 = vadd.f32 0.0, %v979
        %v981 = vpop.f32.mrf.mxu0
        %v982 = vadd.f32 0.0, %v981
        %983 = vdwg.mxu0
        %984 = vmatprep.subr.mxu0 0.0
        %985 = vmatpush1.msra.mxu0 0.0
        %986 = vmatprep.subr.mxu0 0.0
        %987 = vmatpush1.msra.mxu0 0.0
        %988 = vmatprep.subr.mxu0 0.0
        %989 = vmatpush1.msra.mxu0 0.0
        %990 = vmatprep.subr.mxu0 0.0
        %991 = vmatpush1.msra.mxu0 0.0
        %992 = vmatprep.subr.mxu0 0.0
        %993 = vmatpush1.msra.mxu0 0.0
        %994 = vmatprep.subr.mxu0 0.0
        %995 = vmatpush1.msra.mxu0 0.0
        %996 = vmatprep.subr.mxu0 0.0
        %997 = vmatpush1.msra.mxu0 0.0
        %998 = vmatprep.subr.mxu0 0.0
        %999 = vmatpush1.msra.mxu0 0.0
        %1000 = vmatprep.subr.mxu0 0.0
        %1001 = vmatpush1.msra.mxu0 0.0
        %1002 = vmatprep.subr.mxu0 0.0
        %1003 = vmatpush1.msra.mxu0 0.0
        %1004 = vmatprep.subr.mxu0 0.0
        %1005 = vmatpush1.msra.mxu0 0.0
        %1006 = vmatprep.subr.mxu0 0.0
        %1007 = vmatpush1.msra.mxu0 0.0
        %1008 = vmatprep.subr.mxu0 0.0
        %1009 = vmatpush1.msra.mxu0 0.0
        %1010 = vmatprep.subr.mxu0 0.0
        %1011 = vmatpush1.msra.mxu0 0.0
        %1012 = vmatprep.subr.mxu0 0.0
        %1013 = vmatpush1.msra.mxu0 0.0
        %1014 = vmatprep.subr.mxu0 0.0
        %1015 = vmatpush1.msra.mxu0 %v906
        %1016 = vmatprep.subr.mxu0 0.0
        %1017 = vmatpush2.msra.mxu0 0.0
        %1018 = vmatprep.subr.mxu0 0.0
        %1019 = vmatpush2.msra.mxu0 0.0
        %1020 = vmatprep.subr.mxu0 0.0
        %1021 = vmatpush2.msra.mxu0 0.0
        %1022 = vmatprep.subr.mxu0 0.0
        %1023 = vmatpush2.msra.mxu0 0.0
        %1024 = vmatprep.subr.mxu0 0.0
        %1025 = vmatpush2.msra.mxu0 0.0
        %1026 = vmatprep.subr.mxu0 0.0
        %1027 = vmatpush2.msra.mxu0 0.0
        %1028 = vmatprep.subr.mxu0 0.0
        %1029 = vmatpush2.msra.mxu0 0.0
        %1030 = vmatprep.subr.mxu0 0.0
        %1031 = vmatpush2.msra.mxu0 0.0
        %1032 = vmatprep.subr.mxu0 0.0
        %1033 = vmatpush2.msra.mxu0 0.0
        %1034 = vmatprep.subr.mxu0 0.0
        %1035 = vmatpush2.msra.mxu0 0.0
        %1036 = vmatprep.subr.mxu0 0.0
        %1037 = vmatpush2.msra.mxu0 0.0
        %1038 = vmatprep.subr.mxu0 0.0
        %1039 = vmatpush2.msra.mxu0 0.0
        %1040 = vmatprep.subr.mxu0 0.0
        %1041 = vmatpush2.msra.mxu0 0.0
        %1042 = vmatprep.subr.mxu0 0.0
        %1043 = vmatpush2.msra.mxu0 0.0
        %1044 = vmatprep.subr.mxu0 0.0
        %1045 = vmatpush2.msra.mxu0 0.0
        %1046 = vmatprep.subr.mxu0 0.0
        %1047 = vmatpush2.msra.mxu0 0.0
        %1048 = vmatprep.mubr.f32.mxu0 0.0
        %1049 = vmatmul.mubr.f32.gmra.mxu0 %v911
        %v1050 = vpop.f32.mrf.mxu0
        %v1051 = vadd.f32 0.0, %v1050
        %v1052 = vpop.f32.mrf.mxu0
        %1053 = vdwg.mxu0
        %v1054 = vadd.f32 %v890, %v980
        %v1055 = vadd.f32 %v891, %v982
        %v1056 = vadd.f32 %v892, %v1051
        %s1057 = scalar_lea.vmem %s1, 20
        %v1058 = vld [vmem:[%s1057] sm:$0xf]
        %1059 = vrot.lane.b32.xlu0 %v250, 102
        %v1060 = vpop.permute.xlu0 %1059
        %1061 = vrot.lane.b32.xlu0 %v251, 102
        %v1062 = vpop.permute.xlu0 %1061
        %1063 = vrot.lane.b32.xlu0 %v252, 102
        %v1064 = vpop.permute.xlu0 %1063
        %1065 = vrot.lane.b32.xlu0 %v254, 102
        %v1066 = vpop.permute.xlu0 %1065
        %vm1067 = vcmask 834560
        %v1068 = vsel %vm1067, %v1060, %v1062
        %v1069 = vsel %vm1067, %v1062, %v1064
        %v1070 = vsel %vm1067, %v1064, %v1066
        %v1075 = vsel %vm276, %v1058, 0
        %1077 = vmatprep.subr.mxu0 0.0
        %1078 = vmatpush1.msra.mxu0 0.0
        %1079 = vmatprep.subr.mxu0 0.0
        %1080 = vmatpush1.msra.mxu0 0.0
        %1081 = vmatprep.subr.mxu0 0.0
        %1082 = vmatpush1.msra.mxu0 0.0
        %1083 = vmatprep.subr.mxu0 0.0
        %1084 = vmatpush1.msra.mxu0 0.0
        %1085 = vmatprep.subr.mxu0 0.0
        %1086 = vmatpush1.msra.mxu0 0.0
        %1087 = vmatprep.subr.mxu0 0.0
        %1088 = vmatpush1.msra.mxu0 0.0
        %1089 = vmatprep.subr.mxu0 0.0
        %1090 = vmatpush1.msra.mxu0 0.0
        %1091 = vmatprep.subr.mxu0 0.0
        %1092 = vmatpush1.msra.mxu0 0.0
        %1093 = vmatprep.subr.mxu0 0.0
        %1094 = vmatpush1.msra.mxu0 0.0
        %1095 = vmatprep.subr.mxu0 0.0
        %1096 = vmatpush1.msra.mxu0 0.0
        %1097 = vmatprep.subr.mxu0 0.0
        %1098 = vmatpush1.msra.mxu0 0.0
        %1099 = vmatprep.subr.mxu0 0.0
        %1100 = vmatpush1.msra.mxu0 0.0
        %1101 = vmatprep.subr.mxu0 0.0
        %1102 = vmatpush1.msra.mxu0 0.0
        %1103 = vmatprep.subr.mxu0 0.0
        %1104 = vmatpush1.msra.mxu0 0.0
        %1105 = vmatprep.subr.mxu0 0.0
        %1106 = vmatpush1.msra.mxu0 0.0
        %1107 = vmatprep.subr.mxu0 %v1069
        %1108 = vmatpush1.msra.mxu0 %v1068
        %1109 = vmatprep.subr.mxu0 0.0
        %1110 = vmatpush2.msra.mxu0 0.0
        %1111 = vmatprep.subr.mxu0 0.0
        %1112 = vmatpush2.msra.mxu0 0.0
        %1113 = vmatprep.subr.mxu0 0.0
        %1114 = vmatpush2.msra.mxu0 0.0
        %1115 = vmatprep.subr.mxu0 0.0
        %1116 = vmatpush2.msra.mxu0 0.0
        %1117 = vmatprep.subr.mxu0 0.0
        %1118 = vmatpush2.msra.mxu0 0.0
        %1119 = vmatprep.subr.mxu0 0.0
        %1120 = vmatpush2.msra.mxu0 0.0
        %1121 = vmatprep.subr.mxu0 0.0
        %1122 = vmatpush2.msra.mxu0 0.0
        %1123 = vmatprep.subr.mxu0 0.0
        %1124 = vmatpush2.msra.mxu0 0.0
        %1125 = vmatprep.subr.mxu0 0.0
        %1126 = vmatpush2.msra.mxu0 0.0
        %1127 = vmatprep.subr.mxu0 0.0
        %1128 = vmatpush2.msra.mxu0 0.0
        %1129 = vmatprep.subr.mxu0 0.0
        %1130 = vmatpush2.msra.mxu0 0.0
        %1131 = vmatprep.subr.mxu0 0.0
        %1132 = vmatpush2.msra.mxu0 0.0
        %1133 = vmatprep.subr.mxu0 0.0
        %1134 = vmatpush2.msra.mxu0 0.0
        %1135 = vmatprep.subr.mxu0 0.0
        %1136 = vmatpush2.msra.mxu0 0.0
        %1137 = vmatprep.subr.mxu0 0.0
        %1138 = vmatpush2.msra.mxu0 0.0
        %1139 = vmatprep.subr.mxu0 0.0
        %1140 = vmatpush2.msra.mxu0 0.0
        %1141 = vmatprep.mubr.f32.mxu0 0.0
        %1142 = vmatmul.mubr.f32.gmra.mxu0 %v1075
        %v1143 = vpop.f32.mrf.mxu0
        %v1144 = vadd.f32 0.0, %v1143
        %v1145 = vpop.f32.mrf.mxu0
        %v1146 = vadd.f32 0.0, %v1145
        %1147 = vdwg.mxu0
        %1148 = vmatprep.subr.mxu0 0.0
        %1149 = vmatpush1.msra.mxu0 0.0
        %1150 = vmatprep.subr.mxu0 0.0
        %1151 = vmatpush1.msra.mxu0 0.0
        %1152 = vmatprep.subr.mxu0 0.0
        %1153 = vmatpush1.msra.mxu0 0.0
        %1154 = vmatprep.subr.mxu0 0.0
        %1155 = vmatpush1.msra.mxu0 0.0
        %1156 = vmatprep.subr.mxu0 0.0
        %1157 = vmatpush1.msra.mxu0 0.0
        %1158 = vmatprep.subr.mxu0 0.0
        %1159 = vmatpush1.msra.mxu0 0.0
        %1160 = vmatprep.subr.mxu0 0.0
        %1161 = vmatpush1.msra.mxu0 0.0
        %1162 = vmatprep.subr.mxu0 0.0
        %1163 = vmatpush1.msra.mxu0 0.0
        %1164 = vmatprep.subr.mxu0 0.0
        %1165 = vmatpush1.msra.mxu0 0.0
        %1166 = vmatprep.subr.mxu0 0.0
        %1167 = vmatpush1.msra.mxu0 0.0
        %1168 = vmatprep.subr.mxu0 0.0
        %1169 = vmatpush1.msra.mxu0 0.0
        %1170 = vmatprep.subr.mxu0 0.0
        %1171 = vmatpush1.msra.mxu0 0.0
        %1172 = vmatprep.subr.mxu0 0.0
        %1173 = vmatpush1.msra.mxu0 0.0
        %1174 = vmatprep.subr.mxu0 0.0
        %1175 = vmatpush1.msra.mxu0 0.0
        %1176 = vmatprep.subr.mxu0 0.0
        %1177 = vmatpush1.msra.mxu0 0.0
        %1178 = vmatprep.subr.mxu0 0.0
        %1179 = vmatpush1.msra.mxu0 %v1070
        %1180 = vmatprep.subr.mxu0 0.0
        %1181 = vmatpush2.msra.mxu0 0.0
        %1182 = vmatprep.subr.mxu0 0.0
        %1183 = vmatpush2.msra.mxu0 0.0
        %1184 = vmatprep.subr.mxu0 0.0
        %1185 = vmatpush2.msra.mxu0 0.0
        %1186 = vmatprep.subr.mxu0 0.0
        %1187 = vmatpush2.msra.mxu0 0.0
        %1188 = vmatprep.subr.mxu0 0.0
        %1189 = vmatpush2.msra.mxu0 0.0
        %1190 = vmatprep.subr.mxu0 0.0
        %1191 = vmatpush2.msra.mxu0 0.0
        %1192 = vmatprep.subr.mxu0 0.0
        %1193 = vmatpush2.msra.mxu0 0.0
        %1194 = vmatprep.subr.mxu0 0.0
        %1195 = vmatpush2.msra.mxu0 0.0
        %1196 = vmatprep.subr.mxu0 0.0
        %1197 = vmatpush2.msra.mxu0 0.0
        %1198 = vmatprep.subr.mxu0 0.0
        %1199 = vmatpush2.msra.mxu0 0.0
        %1200 = vmatprep.subr.mxu0 0.0
        %1201 = vmatpush2.msra.mxu0 0.0
        %1202 = vmatprep.subr.mxu0 0.0
        %1203 = vmatpush2.msra.mxu0 0.0
        %1204 = vmatprep.subr.mxu0 0.0
        %1205 = vmatpush2.msra.mxu0 0.0
        %1206 = vmatprep.subr.mxu0 0.0
        %1207 = vmatpush2.msra.mxu0 0.0
        %1208 = vmatprep.subr.mxu0 0.0
        %1209 = vmatpush2.msra.mxu0 0.0
        %1210 = vmatprep.subr.mxu0 0.0
        %1211 = vmatpush2.msra.mxu0 0.0
        %1212 = vmatprep.mubr.f32.mxu0 0.0
        %1213 = vmatmul.mubr.f32.gmra.mxu0 %v1075
        %v1214 = vpop.f32.mrf.mxu0
        %v1215 = vadd.f32 0.0, %v1214
        %v1216 = vpop.f32.mrf.mxu0
        %1217 = vdwg.mxu0
        %v1218 = vadd.f32 %v1054, %v1144
        %v1219 = vadd.f32 %v1055, %v1146
        %v1220 = vadd.f32 %v1056, %v1215
        %s1221 = scalar_lea.vmem %s1, 24
        %v1222 = vld [vmem:[%s1221] sm:$0xf]
        %1223 = vrot.lane.b32.xlu0 %v250, 80
        %v1224 = vpop.permute.xlu0 %1223
        %1225 = vrot.lane.b32.xlu0 %v251, 80
        %v1226 = vpop.permute.xlu0 %1225
        %1227 = vrot.lane.b32.xlu0 %v252, 80
        %v1228 = vpop.permute.xlu0 %1227
        %1229 = vrot.lane.b32.xlu0 %v254, 80
        %v1230 = vpop.permute.xlu0 %1229
        %vm1231 = vcmask 654336
        %v1232 = vsel %vm1231, %v1224, %v1226
        %v1233 = vsel %vm1231, %v1226, %v1228
        %v1234 = vsel %vm1231, %v1228, %v1230
        %v1239 = vsel %vm276, %v1222, 0
        %1241 = vmatprep.subr.mxu0 0.0
        %1242 = vmatpush1.msra.mxu0 0.0
        %1243 = vmatprep.subr.mxu0 0.0
        %1244 = vmatpush1.msra.mxu0 0.0
        %1245 = vmatprep.subr.mxu0 0.0
        %1246 = vmatpush1.msra.mxu0 0.0
        %1247 = vmatprep.subr.mxu0 0.0
        %1248 = vmatpush1.msra.mxu0 0.0
        %1249 = vmatprep.subr.mxu0 0.0
        %1250 = vmatpush1.msra.mxu0 0.0
        %1251 = vmatprep.subr.mxu0 0.0
        %1252 = vmatpush1.msra.mxu0 0.0
        %1253 = vmatprep.subr.mxu0 0.0
        %1254 = vmatpush1.msra.mxu0 0.0
        %1255 = vmatprep.subr.mxu0 0.0
        %1256 = vmatpush1.msra.mxu0 0.0
        %1257 = vmatprep.subr.mxu0 0.0
        %1258 = vmatpush1.msra.mxu0 0.0
        %1259 = vmatprep.subr.mxu0 0.0
        %1260 = vmatpush1.msra.mxu0 0.0
        %1261 = vmatprep.subr.mxu0 0.0
        %1262 = vmatpush1.msra.mxu0 0.0
        %1263 = vmatprep.subr.mxu0 0.0
        %1264 = vmatpush1.msra.mxu0 0.0
        %1265 = vmatprep.subr.mxu0 0.0
        %1266 = vmatpush1.msra.mxu0 0.0
        %1267 = vmatprep.subr.mxu0 0.0
        %1268 = vmatpush1.msra.mxu0 0.0
        %1269 = vmatprep.subr.mxu0 0.0
        %1270 = vmatpush1.msra.mxu0 0.0
        %1271 = vmatprep.subr.mxu0 %v1233
        %1272 = vmatpush1.msra.mxu0 %v1232
        %1273 = vmatprep.subr.mxu0 0.0
        %1274 = vmatpush2.msra.mxu0 0.0
        %1275 = vmatprep.subr.mxu0 0.0
        %1276 = vmatpush2.msra.mxu0 0.0
        %1277 = vmatprep.subr.mxu0 0.0
        %1278 = vmatpush2.msra.mxu0 0.0
        %1279 = vmatprep.subr.mxu0 0.0
        %1280 = vmatpush2.msra.mxu0 0.0
        %1281 = vmatprep.subr.mxu0 0.0
        %1282 = vmatpush2.msra.mxu0 0.0
        %1283 = vmatprep.subr.mxu0 0.0
        %1284 = vmatpush2.msra.mxu0 0.0
        %1285 = vmatprep.subr.mxu0 0.0
        %1286 = vmatpush2.msra.mxu0 0.0
        %1287 = vmatprep.subr.mxu0 0.0
        %1288 = vmatpush2.msra.mxu0 0.0
        %1289 = vmatprep.subr.mxu0 0.0
        %1290 = vmatpush2.msra.mxu0 0.0
        %1291 = vmatprep.subr.mxu0 0.0
        %1292 = vmatpush2.msra.mxu0 0.0
        %1293 = vmatprep.subr.mxu0 0.0
        %1294 = vmatpush2.msra.mxu0 0.0
        %1295 = vmatprep.subr.mxu0 0.0
        %1296 = vmatpush2.msra.mxu0 0.0
        %1297 = vmatprep.subr.mxu0 0.0
        %1298 = vmatpush2.msra.mxu0 0.0
        %1299 = vmatprep.subr.mxu0 0.0
        %1300 = vmatpush2.msra.mxu0 0.0
        %1301 = vmatprep.subr.mxu0 0.0
        %1302 = vmatpush2.msra.mxu0 0.0
        %1303 = vmatprep.subr.mxu0 0.0
        %1304 = vmatpush2.msra.mxu0 0.0
        %1305 = vmatprep.mubr.f32.mxu0 0.0
        %1306 = vmatmul.mubr.f32.gmra.mxu0 %v1239
        %v1307 = vpop.f32.mrf.mxu0
        %v1308 = vadd.f32 0.0, %v1307
        %v1309 = vpop.f32.mrf.mxu0
        %v1310 = vadd.f32 0.0, %v1309
        %1311 = vdwg.mxu0
        %1312 = vmatprep.subr.mxu0 0.0
        %1313 = vmatpush1.msra.mxu0 0.0
        %1314 = vmatprep.subr.mxu0 0.0
        %1315 = vmatpush1.msra.mxu0 0.0
        %1316 = vmatprep.subr.mxu0 0.0
        %1317 = vmatpush1.msra.mxu0 0.0
        %1318 = vmatprep.subr.mxu0 0.0
        %1319 = vmatpush1.msra.mxu0 0.0
        %1320 = vmatprep.subr.mxu0 0.0
        %1321 = vmatpush1.msra.mxu0 0.0
        %1322 = vmatprep.subr.mxu0 0.0
        %1323 = vmatpush1.msra.mxu0 0.0
        %1324 = vmatprep.subr.mxu0 0.0
        %1325 = vmatpush1.msra.mxu0 0.0
        %1326 = vmatprep.subr.mxu0 0.0
        %1327 = vmatpush1.msra.mxu0 0.0
        %1328 = vmatprep.subr.mxu0 0.0
        %1329 = vmatpush1.msra.mxu0 0.0
        %1330 = vmatprep.subr.mxu0 0.0
        %1331 = vmatpush1.msra.mxu0 0.0
        %1332 = vmatprep.subr.mxu0 0.0
        %1333 = vmatpush1.msra.mxu0 0.0
        %1334 = vmatprep.subr.mxu0 0.0
        %1335 = vmatpush1.msra.mxu0 0.0
        %1336 = vmatprep.subr.mxu0 0.0
        %1337 = vmatpush1.msra.mxu0 0.0
        %1338 = vmatprep.subr.mxu0 0.0
        %1339 = vmatpush1.msra.mxu0 0.0
        %1340 = vmatprep.subr.mxu0 0.0
        %1341 = vmatpush1.msra.mxu0 0.0
        %1342 = vmatprep.subr.mxu0 0.0
        %1343 = vmatpush1.msra.mxu0 %v1234
        %1344 = vmatprep.subr.mxu0 0.0
        %1345 = vmatpush2.msra.mxu0 0.0
        %1346 = vmatprep.subr.mxu0 0.0
        %1347 = vmatpush2.msra.mxu0 0.0
        %1348 = vmatprep.subr.mxu0 0.0
        %1349 = vmatpush2.msra.mxu0 0.0
        %1350 = vmatprep.subr.mxu0 0.0
        %1351 = vmatpush2.msra.mxu0 0.0
        %1352 = vmatprep.subr.mxu0 0.0
        %1353 = vmatpush2.msra.mxu0 0.0
        %1354 = vmatprep.subr.mxu0 0.0
        %1355 = vmatpush2.msra.mxu0 0.0
        %1356 = vmatprep.subr.mxu0 0.0
        %1357 = vmatpush2.msra.mxu0 0.0
        %1358 = vmatprep.subr.mxu0 0.0
        %1359 = vmatpush2.msra.mxu0 0.0
        %1360 = vmatprep.subr.mxu0 0.0
        %1361 = vmatpush2.msra.mxu0 0.0
        %1362 = vmatprep.subr.mxu0 0.0
        %1363 = vmatpush2.msra.mxu0 0.0
        %1364 = vmatprep.subr.mxu0 0.0
        %1365 = vmatpush2.msra.mxu0 0.0
        %1366 = vmatprep.subr.mxu0 0.0
        %1367 = vmatpush2.msra.mxu0 0.0
        %1368 = vmatprep.subr.mxu0 0.0
        %1369 = vmatpush2.msra.mxu0 0.0
        %1370 = vmatprep.subr.mxu0 0.0
        %1371 = vmatpush2.msra.mxu0 0.0
        %1372 = vmatprep.subr.mxu0 0.0
        %1373 = vmatpush2.msra.mxu0 0.0
        %1374 = vmatprep.subr.mxu0 0.0
        %1375 = vmatpush2.msra.mxu0 0.0
        %1376 = vmatprep.mubr.f32.mxu0 0.0
        %1377 = vmatmul.mubr.f32.gmra.mxu0 %v1239
        %v1378 = vpop.f32.mrf.mxu0
        %v1379 = vadd.f32 0.0, %v1378
        %v1380 = vpop.f32.mrf.mxu0
        %1381 = vdwg.mxu0
        %v1382 = vadd.f32 %v1218, %v1308
        %v1383 = vadd.f32 %v1219, %v1310
        %v1384 = vadd.f32 %v1220, %v1379
        %s1385 = scalar_lea.vmem %s1, 28
        %v1386 = vld [vmem:[%s1385] sm:$0xf]
        %1387 = vrot.lane.b32.xlu0 %v250, 79
        %v1388 = vpop.permute.xlu0 %1387
        %1389 = vrot.lane.b32.xlu0 %v251, 79
        %v1390 = vpop.permute.xlu0 %1389
        %1391 = vrot.lane.b32.xlu0 %v252, 79
        %v1392 = vpop.permute.xlu0 %1391
        %1393 = vrot.lane.b32.xlu0 %v254, 79
        %v1394 = vpop.permute.xlu0 %1393
        %vm1395 = vcmask 646144
        %v1396 = vsel %vm1395, %v1388, %v1390
        %v1397 = vsel %vm1395, %v1390, %v1392
        %v1398 = vsel %vm1395, %v1392, %v1394
        %v1403 = vsel %vm276, %v1386, 0
        %1405 = vmatprep.subr.mxu0 0.0
        %1406 = vmatpush1.msra.mxu0 0.0
        %1407 = vmatprep.subr.mxu0 0.0
        %1408 = vmatpush1.msra.mxu0 0.0
        %1409 = vmatprep.subr.mxu0 0.0
        %1410 = vmatpush1.msra.mxu0 0.0
        %1411 = vmatprep.subr.mxu0 0.0
        %1412 = vmatpush1.msra.mxu0 0.0
        %1413 = vmatprep.subr.mxu0 0.0
        %1414 = vmatpush1.msra.mxu0 0.0
        %1415 = vmatprep.subr.mxu0 0.0
        %1416 = vmatpush1.msra.mxu0 0.0
        %1417 = vmatprep.subr.mxu0 0.0
        %1418 = vmatpush1.msra.mxu0 0.0
        %1419 = vmatprep.subr.mxu0 0.0
        %1420 = vmatpush1.msra.mxu0 0.0
        %1421 = vmatprep.subr.mxu0 0.0
        %1422 = vmatpush1.msra.mxu0 0.0
        %1423 = vmatprep.subr.mxu0 0.0
        %1424 = vmatpush1.msra.mxu0 0.0
        %1425 = vmatprep.subr.mxu0 0.0
        %1426 = vmatpush1.msra.mxu0 0.0
        %1427 = vmatprep.subr.mxu0 0.0
        %1428 = vmatpush1.msra.mxu0 0.0
        %1429 = vmatprep.subr.mxu0 0.0
        %1430 = vmatpush1.msra.mxu0 0.0
        %1431 = vmatprep.subr.mxu0 0.0
        %1432 = vmatpush1.msra.mxu0 0.0
        %1433 = vmatprep.subr.mxu0 0.0
        %1434 = vmatpush1.msra.mxu0 0.0
        %1435 = vmatprep.subr.mxu0 %v1397
        %1436 = vmatpush1.msra.mxu0 %v1396
        %1437 = vmatprep.subr.mxu0 0.0
        %1438 = vmatpush2.msra.mxu0 0.0
        %1439 = vmatprep.subr.mxu0 0.0
        %1440 = vmatpush2.msra.mxu0 0.0
        %1441 = vmatprep.subr.mxu0 0.0
        %1442 = vmatpush2.msra.mxu0 0.0
        %1443 = vmatprep.subr.mxu0 0.0
        %1444 = vmatpush2.msra.mxu0 0.0
        %1445 = vmatprep.subr.mxu0 0.0
        %1446 = vmatpush2.msra.mxu0 0.0
        %1447 = vmatprep.subr.mxu0 0.0
        %1448 = vmatpush2.msra.mxu0 0.0
        %1449 = vmatprep.subr.mxu0 0.0
        %1450 = vmatpush2.msra.mxu0 0.0
        %1451 = vmatprep.subr.mxu0 0.0
        %1452 = vmatpush2.msra.mxu0 0.0
        %1453 = vmatprep.subr.mxu0 0.0
        %1454 = vmatpush2.msra.mxu0 0.0
        %1455 = vmatprep.subr.mxu0 0.0
        %1456 = vmatpush2.msra.mxu0 0.0
        %1457 = vmatprep.subr.mxu0 0.0
        %1458 = vmatpush2.msra.mxu0 0.0
        %1459 = vmatprep.subr.mxu0 0.0
        %1460 = vmatpush2.msra.mxu0 0.0
        %1461 = vmatprep.subr.mxu0 0.0
        %1462 = vmatpush2.msra.mxu0 0.0
        %1463 = vmatprep.subr.mxu0 0.0
        %1464 = vmatpush2.msra.mxu0 0.0
        %1465 = vmatprep.subr.mxu0 0.0
        %1466 = vmatpush2.msra.mxu0 0.0
        %1467 = vmatprep.subr.mxu0 0.0
        %1468 = vmatpush2.msra.mxu0 0.0
        %1469 = vmatprep.mubr.f32.mxu0 0.0
        %1470 = vmatmul.mubr.f32.gmra.mxu0 %v1403
        %v1471 = vpop.f32.mrf.mxu0
        %v1472 = vadd.f32 0.0, %v1471
        %v1473 = vpop.f32.mrf.mxu0
        %v1474 = vadd.f32 0.0, %v1473
        %1475 = vdwg.mxu0
        %1476 = vmatprep.subr.mxu0 0.0
        %1477 = vmatpush1.msra.mxu0 0.0
        %1478 = vmatprep.subr.mxu0 0.0
        %1479 = vmatpush1.msra.mxu0 0.0
        %1480 = vmatprep.subr.mxu0 0.0
        %1481 = vmatpush1.msra.mxu0 0.0
        %1482 = vmatprep.subr.mxu0 0.0
        %1483 = vmatpush1.msra.mxu0 0.0
        %1484 = vmatprep.subr.mxu0 0.0
        %1485 = vmatpush1.msra.mxu0 0.0
        %1486 = vmatprep.subr.mxu0 0.0
        %1487 = vmatpush1.msra.mxu0 0.0
        %1488 = vmatprep.subr.mxu0 0.0
        %1489 = vmatpush1.msra.mxu0 0.0
        %1490 = vmatprep.subr.mxu0 0.0
        %1491 = vmatpush1.msra.mxu0 0.0
        %1492 = vmatprep.subr.mxu0 0.0
        %1493 = vmatpush1.msra.mxu0 0.0
        %1494 = vmatprep.subr.mxu0 0.0
        %1495 = vmatpush1.msra.mxu0 0.0
        %1496 = vmatprep.subr.mxu0 0.0
        %1497 = vmatpush1.msra.mxu0 0.0
        %1498 = vmatprep.subr.mxu0 0.0
        %1499 = vmatpush1.msra.mxu0 0.0
        %1500 = vmatprep.subr.mxu0 0.0
        %1501 = vmatpush1.msra.mxu0 0.0
        %1502 = vmatprep.subr.mxu0 0.0
        %1503 = vmatpush1.msra.mxu0 0.0
        %1504 = vmatprep.subr.mxu0 0.0
        %1505 = vmatpush1.msra.mxu0 0.0
        %1506 = vmatprep.subr.mxu0 0.0
        %1507 = vmatpush1.msra.mxu0 %v1398
        %1508 = vmatprep.subr.mxu0 0.0
        %1509 = vmatpush2.msra.mxu0 0.0
        %1510 = vmatprep.subr.mxu0 0.0
        %1511 = vmatpush2.msra.mxu0 0.0
        %1512 = vmatprep.subr.mxu0 0.0
        %1513 = vmatpush2.msra.mxu0 0.0
        %1514 = vmatprep.subr.mxu0 0.0
        %1515 = vmatpush2.msra.mxu0 0.0
        %1516 = vmatprep.subr.mxu0 0.0
        %1517 = vmatpush2.msra.mxu0 0.0
        %1518 = vmatprep.subr.mxu0 0.0
        %1519 = vmatpush2.msra.mxu0 0.0
        %1520 = vmatprep.subr.mxu0 0.0
        %1521 = vmatpush2.msra.mxu0 0.0
        %1522 = vmatprep.subr.mxu0 0.0
        %1523 = vmatpush2.msra.mxu0 0.0
        %1524 = vmatprep.subr.mxu0 0.0
        %1525 = vmatpush2.msra.mxu0 0.0
        %1526 = vmatprep.subr.mxu0 0.0
        %1527 = vmatpush2.msra.mxu0 0.0
        %1528 = vmatprep.subr.mxu0 0.0
        %1529 = vmatpush2.msra.mxu0 0.0
        %1530 = vmatprep.subr.mxu0 0.0
        %1531 = vmatpush2.msra.mxu0 0.0
        %1532 = vmatprep.subr.mxu0 0.0
        %1533 = vmatpush2.msra.mxu0 0.0
        %1534 = vmatprep.subr.mxu0 0.0
        %1535 = vmatpush2.msra.mxu0 0.0
        %1536 = vmatprep.subr.mxu0 0.0
        %1537 = vmatpush2.msra.mxu0 0.0
        %1538 = vmatprep.subr.mxu0 0.0
        %1539 = vmatpush2.msra.mxu0 0.0
        %1540 = vmatprep.mubr.f32.mxu0 0.0
        %1541 = vmatmul.mubr.f32.gmra.mxu0 %v1403
        %v1542 = vpop.f32.mrf.mxu0
        %v1543 = vadd.f32 0.0, %v1542
        %v1544 = vpop.f32.mrf.mxu0
        %1545 = vdwg.mxu0
        %v1546 = vadd.f32 %v1382, %v1472
        %v1547 = vadd.f32 %v1383, %v1474
        %v1548 = vadd.f32 %v1384, %v1543
        %s1549 = scalar_lea.vmem %s1, 32
        %v1550 = vld [vmem:[%s1549] sm:$0xf]
        %1551 = vrot.lane.b32.xlu0 %v250, 78
        %v1552 = vpop.permute.xlu0 %1551
        %1553 = vrot.lane.b32.xlu0 %v251, 78
        %v1554 = vpop.permute.xlu0 %1553
        %1555 = vrot.lane.b32.xlu0 %v252, 78
        %v1556 = vpop.permute.xlu0 %1555
        %1557 = vrot.lane.b32.xlu0 %v254, 78
        %v1558 = vpop.permute.xlu0 %1557
        %vm1559 = vcmask 637952
        %v1560 = vsel %vm1559, %v1552, %v1554
        %v1561 = vsel %vm1559, %v1554, %v1556
        %v1562 = vsel %vm1559, %v1556, %v1558
        %v1567 = vsel %vm276, %v1550, 0
        %1569 = vmatprep.subr.mxu0 0.0
        %1570 = vmatpush1.msra.mxu0 0.0
        %1571 = vmatprep.subr.mxu0 0.0
        %1572 = vmatpush1.msra.mxu0 0.0
        %1573 = vmatprep.subr.mxu0 0.0
        %1574 = vmatpush1.msra.mxu0 0.0
        %1575 = vmatprep.subr.mxu0 0.0
        %1576 = vmatpush1.msra.mxu0 0.0
        %1577 = vmatprep.subr.mxu0 0.0
        %1578 = vmatpush1.msra.mxu0 0.0
        %1579 = vmatprep.subr.mxu0 0.0
        %1580 = vmatpush1.msra.mxu0 0.0
        %1581 = vmatprep.subr.mxu0 0.0
        %1582 = vmatpush1.msra.mxu0 0.0
        %1583 = vmatprep.subr.mxu0 0.0
        %1584 = vmatpush1.msra.mxu0 0.0
        %1585 = vmatprep.subr.mxu0 0.0
        %1586 = vmatpush1.msra.mxu0 0.0
        %1587 = vmatprep.subr.mxu0 0.0
        %1588 = vmatpush1.msra.mxu0 0.0
        %1589 = vmatprep.subr.mxu0 0.0
        %1590 = vmatpush1.msra.mxu0 0.0
        %1591 = vmatprep.subr.mxu0 0.0
        %1592 = vmatpush1.msra.mxu0 0.0
        %1593 = vmatprep.subr.mxu0 0.0
        %1594 = vmatpush1.msra.mxu0 0.0
        %1595 = vmatprep.subr.mxu0 0.0
        %1596 = vmatpush1.msra.mxu0 0.0
        %1597 = vmatprep.subr.mxu0 0.0
        %1598 = vmatpush1.msra.mxu0 0.0
        %1599 = vmatprep.subr.mxu0 %v1561
        %1600 = vmatpush1.msra.mxu0 %v1560
        %1601 = vmatprep.subr.mxu0 0.0
        %1602 = vmatpush2.msra.mxu0 0.0
        %1603 = vmatprep.subr.mxu0 0.0
        %1604 = vmatpush2.msra.mxu0 0.0
        %1605 = vmatprep.subr.mxu0 0.0
        %1606 = vmatpush2.msra.mxu0 0.0
        %1607 = vmatprep.subr.mxu0 0.0
        %1608 = vmatpush2.msra.mxu0 0.0
        %1609 = vmatprep.subr.mxu0 0.0
        %1610 = vmatpush2.msra.mxu0 0.0
        %1611 = vmatprep.subr.mxu0 0.0
        %1612 = vmatpush2.msra.mxu0 0.0
        %1613 = vmatprep.subr.mxu0 0.0
        %1614 = vmatpush2.msra.mxu0 0.0
        %1615 = vmatprep.subr.mxu0 0.0
        %1616 = vmatpush2.msra.mxu0 0.0
        %1617 = vmatprep.subr.mxu0 0.0
        %1618 = vmatpush2.msra.mxu0 0.0
        %1619 = vmatprep.subr.mxu0 0.0
        %1620 = vmatpush2.msra.mxu0 0.0
        %1621 = vmatprep.subr.mxu0 0.0
        %1622 = vmatpush2.msra.mxu0 0.0
        %1623 = vmatprep.subr.mxu0 0.0
        %1624 = vmatpush2.msra.mxu0 0.0
        %1625 = vmatprep.subr.mxu0 0.0
        %1626 = vmatpush2.msra.mxu0 0.0
        %1627 = vmatprep.subr.mxu0 0.0
        %1628 = vmatpush2.msra.mxu0 0.0
        %1629 = vmatprep.subr.mxu0 0.0
        %1630 = vmatpush2.msra.mxu0 0.0
        %1631 = vmatprep.subr.mxu0 0.0
        %1632 = vmatpush2.msra.mxu0 0.0
        %1633 = vmatprep.mubr.f32.mxu0 0.0
        %1634 = vmatmul.mubr.f32.gmra.mxu0 %v1567
        %v1635 = vpop.f32.mrf.mxu0
        %v1636 = vadd.f32 0.0, %v1635
        %v1637 = vpop.f32.mrf.mxu0
        %v1638 = vadd.f32 0.0, %v1637
        %1639 = vdwg.mxu0
        %1640 = vmatprep.subr.mxu0 0.0
        %1641 = vmatpush1.msra.mxu0 0.0
        %1642 = vmatprep.subr.mxu0 0.0
        %1643 = vmatpush1.msra.mxu0 0.0
        %1644 = vmatprep.subr.mxu0 0.0
        %1645 = vmatpush1.msra.mxu0 0.0
        %1646 = vmatprep.subr.mxu0 0.0
        %1647 = vmatpush1.msra.mxu0 0.0
        %1648 = vmatprep.subr.mxu0 0.0
        %1649 = vmatpush1.msra.mxu0 0.0
        %1650 = vmatprep.subr.mxu0 0.0
        %1651 = vmatpush1.msra.mxu0 0.0
        %1652 = vmatprep.subr.mxu0 0.0
        %1653 = vmatpush1.msra.mxu0 0.0
        %1654 = vmatprep.subr.mxu0 0.0
        %1655 = vmatpush1.msra.mxu0 0.0
        %1656 = vmatprep.subr.mxu0 0.0
        %1657 = vmatpush1.msra.mxu0 0.0
        %1658 = vmatprep.subr.mxu0 0.0
        %1659 = vmatpush1.msra.mxu0 0.0
        %1660 = vmatprep.subr.mxu0 0.0
        %1661 = vmatpush1.msra.mxu0 0.0
        %1662 = vmatprep.subr.mxu0 0.0
        %1663 = vmatpush1.msra.mxu0 0.0
        %1664 = vmatprep.subr.mxu0 0.0
        %1665 = vmatpush1.msra.mxu0 0.0
        %1666 = vmatprep.subr.mxu0 0.0
        %1667 = vmatpush1.msra.mxu0 0.0
        %1668 = vmatprep.subr.mxu0 0.0
        %1669 = vmatpush1.msra.mxu0 0.0
        %1670 = vmatprep.subr.mxu0 0.0
        %1671 = vmatpush1.msra.mxu0 %v1562
        %1672 = vmatprep.subr.mxu0 0.0
        %1673 = vmatpush2.msra.mxu0 0.0
        %1674 = vmatprep.subr.mxu0 0.0
        %1675 = vmatpush2.msra.mxu0 0.0
        %1676 = vmatprep.subr.mxu0 0.0
        %1677 = vmatpush2.msra.mxu0 0.0
        %1678 = vmatprep.subr.mxu0 0.0
        %1679 = vmatpush2.msra.mxu0 0.0
        %1680 = vmatprep.subr.mxu0 0.0
        %1681 = vmatpush2.msra.mxu0 0.0
        %1682 = vmatprep.subr.mxu0 0.0
        %1683 = vmatpush2.msra.mxu0 0.0
        %1684 = vmatprep.subr.mxu0 0.0
        %1685 = vmatpush2.msra.mxu0 0.0
        %1686 = vmatprep.subr.mxu0 0.0
        %1687 = vmatpush2.msra.mxu0 0.0
        %1688 = vmatprep.subr.mxu0 0.0
        %1689 = vmatpush2.msra.mxu0 0.0
        %1690 = vmatprep.subr.mxu0 0.0
        %1691 = vmatpush2.msra.mxu0 0.0
        %1692 = vmatprep.subr.mxu0 0.0
        %1693 = vmatpush2.msra.mxu0 0.0
        %1694 = vmatprep.subr.mxu0 0.0
        %1695 = vmatpush2.msra.mxu0 0.0
        %1696 = vmatprep.subr.mxu0 0.0
        %1697 = vmatpush2.msra.mxu0 0.0
        %1698 = vmatprep.subr.mxu0 0.0
        %1699 = vmatpush2.msra.mxu0 0.0
        %1700 = vmatprep.subr.mxu0 0.0
        %1701 = vmatpush2.msra.mxu0 0.0
        %1702 = vmatprep.subr.mxu0 0.0
        %1703 = vmatpush2.msra.mxu0 0.0
        %1704 = vmatprep.mubr.f32.mxu0 0.0
        %1705 = vmatmul.mubr.f32.gmra.mxu0 %v1567
        %v1706 = vpop.f32.mrf.mxu0
        %v1707 = vadd.f32 0.0, %v1706
        %v1708 = vpop.f32.mrf.mxu0
        %1709 = vdwg.mxu0
        %v1710 = vadd.f32 %v1546, %v1636
        %v1711 = vadd.f32 %v1547, %v1638
        %v1712 = vadd.f32 %v1548, %v1707
        %v1713 = vld [vmem:[%s2] sm:$0xf]
        %1715 = vset.pattern.permute.xlu0 0
        %1716 = vperm.xlu0 %1715, %v1713
        %v1717 = vpop.permute.xlu0 %1716
        %v1719 = vadd.f32 %v1710, %v1717
        %v1720 = vadd.f32 %v1711, %v1717
        %v1721 = vadd.f32 %v1712, %v1717
        %v1722 = vmax.f32 %v1719, 0.0
        %v1723 = vmax.f32 %v1720, 0.0
        %v1724 = vmax.f32 %v1721, 0.0
        %v1725 = vld [vmem:[%s5] sm:$0x7]
        %v1727 = vlaneseq
        %v1728 = vshrl.u32 %v1727, 7
        %v1729 = vsub.s32 0, %v1728
        %v1730 = vrot.slane %v1725, %v1729
        %v1731 = vlaneseq
        %v1732 = vshrl.u32 %v1731, 7
        %v1733 = vsub.s32 1, %v1732
        %v1734 = vrot.slane %v1725, %v1733
        %v1735 = vlaneseq
        %v1736 = vshrl.u32 %v1735, 7
        %v1737 = vsub.s32 2, %v1736
        %v1738 = vrot.slane %v1725, %v1737
        %v1742 = vmul.f32 %v1722, %v1730
        %v1743 = vmul.f32 %v1723, %v1734
        %v1744 = vmul.f32 %v1724, %v1738
        %vm1745 = vcmask 1043456
        %v1746 = vsel %vm1745, %v1742, 0.0
        %v1747 = vsel %vm1745, %v1743, 0.0
        %v1748 = vadd.f32 %v1746, %v1747
        %v1749 = vsel %vm1745, %v1744, 0.0
        %v1750 = vadd.f32 %v1748, %v1749
        %1751 = vadd.xlane.f32.xlu0 %v1750
        %v1752 = vpop.xlane.xlu0 %1751
        %v1753 = vld [vmem:[%s3] sm:$0xf]
        %v1754 = vld [vmem:[%s4] sm:$0xf]
        %vm1755 = vcmask 31744
        %v1757 = vsel %vm1755, %v1753, 0
        %v1760 = vsel %vm1745, %v1752, 0
        %1762 = vmatprep.subr.mxu0 0.0
        %1763 = vmatpush1.msra.mxu0 0.0
        %1764 = vmatprep.subr.mxu0 0.0
        %1765 = vmatpush1.msra.mxu0 0.0
        %1766 = vmatprep.subr.mxu0 0.0
        %1767 = vmatpush1.msra.mxu0 0.0
        %1768 = vmatprep.subr.mxu0 0.0
        %1769 = vmatpush1.msra.mxu0 0.0
        %1770 = vmatprep.subr.mxu0 0.0
        %1771 = vmatpush1.msra.mxu0 0.0
        %1772 = vmatprep.subr.mxu0 0.0
        %1773 = vmatpush1.msra.mxu0 0.0
        %1774 = vmatprep.subr.mxu0 0.0
        %1775 = vmatpush1.msra.mxu0 0.0
        %1776 = vmatprep.subr.mxu0 0.0
        %1777 = vmatpush1.msra.mxu0 0.0
        %1778 = vmatprep.subr.mxu0 0.0
        %1779 = vmatpush1.msra.mxu0 0.0
        %1780 = vmatprep.subr.mxu0 0.0
        %1781 = vmatpush1.msra.mxu0 0.0
        %1782 = vmatprep.subr.mxu0 0.0
        %1783 = vmatpush1.msra.mxu0 0.0
        %1784 = vmatprep.subr.mxu0 0.0
        %1785 = vmatpush1.msra.mxu0 0.0
        %1786 = vmatprep.subr.mxu0 0.0
        %1787 = vmatpush1.msra.mxu0 0.0
        %1788 = vmatprep.subr.mxu0 0.0
        %1789 = vmatpush1.msra.mxu0 0.0
        %1790 = vmatprep.subr.mxu0 0.0
        %1791 = vmatpush1.msra.mxu0 0.0
        %1792 = vmatprep.subr.mxu0 0.0
        %1793 = vmatpush1.msra.mxu0 %v1760
        %1794 = vmatprep.subr.mxu0 0.0
        %1795 = vmatpush2.msra.mxu0 0.0
        %1796 = vmatprep.subr.mxu0 0.0
        %1797 = vmatpush2.msra.mxu0 0.0
        %1798 = vmatprep.subr.mxu0 0.0
        %1799 = vmatpush2.msra.mxu0 0.0
        %1800 = vmatprep.subr.mxu0 0.0
        %1801 = vmatpush2.msra.mxu0 0.0
        %1802 = vmatprep.subr.mxu0 0.0
        %1803 = vmatpush2.msra.mxu0 0.0
        %1804 = vmatprep.subr.mxu0 0.0
        %1805 = vmatpush2.msra.mxu0 0.0
        %1806 = vmatprep.subr.mxu0 0.0
        %1807 = vmatpush2.msra.mxu0 0.0
        %1808 = vmatprep.subr.mxu0 0.0
        %1809 = vmatpush2.msra.mxu0 0.0
        %1810 = vmatprep.subr.mxu0 0.0
        %1811 = vmatpush2.msra.mxu0 0.0
        %1812 = vmatprep.subr.mxu0 0.0
        %1813 = vmatpush2.msra.mxu0 0.0
        %1814 = vmatprep.subr.mxu0 0.0
        %1815 = vmatpush2.msra.mxu0 0.0
        %1816 = vmatprep.subr.mxu0 0.0
        %1817 = vmatpush2.msra.mxu0 0.0
        %1818 = vmatprep.subr.mxu0 0.0
        %1819 = vmatpush2.msra.mxu0 0.0
        %1820 = vmatprep.subr.mxu0 0.0
        %1821 = vmatpush2.msra.mxu0 0.0
        %1822 = vmatprep.subr.mxu0 0.0
        %1823 = vmatpush2.msra.mxu0 0.0
        %1824 = vmatprep.subr.mxu0 0.0
        %1825 = vmatpush2.msra.mxu0 0.0
        %1826 = vmatprep.mubr.f32.mxu0 0.0
        %1827 = vmatmul.mubr.f32.gmra.mxu0 %v1757
        %v1828 = vpop.f32.mrf.mxu0
        %v1829 = vadd.f32 %v1754, %v1828
        %v1830 = vpop.f32.mrf.mxu0
        %1831 = vdwg.mxu0
        %v1832 = vxor.u32 %v1829, 2147483648
        %v1833 = vmul.f32 %v1832, 1.442695
        %v1834 = vpow.pop %v1833
        %v1835 = vadd.f32 %v1834, 1.0
        %v1836 = vrcp.pop %v1835
        %v1837 = vmul.f32 1.0, %v1836
        %1839 = vset.pattern.permute.xlu0 0
        %1840 = vperm.xlu0 %1839, %v1837
        %v1841 = vpop.permute.xlu0 %1840
        %v1843 = vmul.f32 %v1722, %v1841
        %v1844 = vmul.f32 %v1723, %v1841
        %v1845 = vmul.f32 %v1724, %v1841
        %v1848 = vcombine.low %v1843, %v1844
        %1850 = vst [vmem:[%s244] sm:$0xff] %v1848
        %1851 = vst [vmem:[%s244 + $0x8] sm:$0xf] %v1845
        %s1852 = sand.u32 %s159, 1
        %s1853 = scalar_lea.sflag [#allocation3], %s1852
        %s1854 = sand.u32 %s159, 1
        %s1855 = smul.addr %s1854, 12
        %s1856 = scalar_lea.vmem [#allocation2], %s1855
        // Predicated region
        $region45: #{tpu_custom_call.1} parent=43 // pred_check
          %p1857 = pneg %p169
        $region46: #{tpu_custom_call.1} parent=43 // pred_check_branch
          %1859 = sbr.rel (%p1857) target = $region48
        $region47: #{tpu_custom_call.1} parent=43 // pred_region
          %s1861 = ssub.s32 192, 192
          %1862 = vsyncadd %s1853, %s1861
          %s1863 = smul.addr %s20, 3
          %s1864 = smul.addr %s1863, 64
          %s1865 = scalar_lea.hbm %s6, %s1864
          %s1867 = sshll.u32 %s1856, 4
          %s1868 = int_to_ptr.vmem [resolvable:$true] %s1867
          %1870 = dma.vmem_to_hbm [thread:$0]  %s1868, 192, %s1865, %s1853
        $region48: #{tpu_custom_call.1} parent=43 // pred_fallthru
          _
      $region44: #{tpu_custom_call.1} parent=5 // pred_fallthru
        _
      %p1871 = scmp.le.s32.totalorder 2, %s15
      // Predicated region
      $region49: #{tpu_custom_call.1} parent=5 // pred_check
        %p1872 = pneg %p1871
      $region50: #{tpu_custom_call.1} parent=5 // pred_check_branch
        %1874 = sbr.rel (%p1872) target = $region52
      $region51: #{tpu_custom_call.1} parent=5 // pred_region
        %s1875 = ssub.s32 %s15, 2
        // Predicated region
        $region53: #{tpu_custom_call.1} parent=51 // pred_check
          %p1876 = pneg %p175
        $region54: #{tpu_custom_call.1} parent=51 // pred_check_branch
          %1878 = sbr.rel (%p1876) target = $region56
        $region55: #{tpu_custom_call.1} parent=51 // pred_region
          %s1879 = sand.u32 %s160, 1
          %s1880 = scalar_lea.sflag [#allocation3], %s1879
          %s1881 = sand.u32 %s160, 1
          %s1882 = smul.addr %s1881, 12
          %s1883 = scalar_lea.vmem [#allocation2], %s1882
          %1884 = dma.done %s1880, 192
        $region56: #{tpu_custom_call.1} parent=51 // pred_fallthru
          _
      $region52: #{tpu_custom_call.1} parent=5 // pred_fallthru
        _
    $region6: #{tpu_custom_call.1} parent=1 // loop_footer
      %s19 = sadd.s32 1, %s15
    $region7: #{tpu_custom_call.1} parent=1 // loop_footer_branch
      %14 = sbr.rel target = $region3
    $region8: #{tpu_custom_call.1} parent=1 // loop_exit
      _
    %1885 = vsyncpa [#allocation3], 1
    %s1886 = scalar_lea.sflag [#allocation3], 1
    %1887 = vsyncpa %s1886, 1

</llo_original>
